<compile_context>
chip_gen: v7x
topology: tpu7x:2x2x1
jax: 0.10.0
libtpu: 0.0.40
codegen_flags: <defaults>
</compile_context>

<pallas_src>
import math

import jax
import jax.numpy as jnp
import numpy as np
from jax.experimental import pallas as pl
from jax.experimental.pallas import tpu as pltpu

ATTN_DIM = 16            # D: model width (single head -> head_dim == D)
NUM_LAYERS = 2
VOCAB = 5
MAX_SEQ_LEN = 512
LANE = 128               # every kernel tensor is zero-padded to 128 lanes
VOCAB_PAD = 8            # padded vocab rows for the one-hot embedding matmul
W_ROWS = (4 * NUM_LAYERS + 2) * LANE   # bf16 weight slab: 10 x (128,128) blocks


# ----------------------------- Pallas kernel --------------------------------
def transformer_kernel(ids_ref, w_ref, vec_ref, o_ref):
    B, S, DP = o_ref.shape
    N = B * S
    D = ATTN_DIM
    f32 = jnp.float32
    bf16 = jnp.bfloat16

    # Row offsets inside the f32 vector slab (must match _pack_params).
    PE0 = VOCAB_PAD
    LV0 = PE0 + N
    CLS0 = LV0 + 8 * NUM_LAYERS
    W1_OFF = 4 * NUM_LAYERS * LANE
    W2_OFF = W1_OFF + LANE

    def dot_w(a, off):
        """(rows,128) f32 activation @ 128x128 bf16 weight block -> f32."""
        return jnp.dot(a.astype(bf16), w_ref[off:off + LANE, :],
                       preferred_element_type=f32)

    # ---- fused embedding gather (one-hot @ table on the MXU) + pos-emb add --
    ids = ids_ref[...]                                             # (N, 1) int32
    onehot = (jax.lax.broadcasted_iota(jnp.int32, (N, VOCAB_PAD), 1)
              == ids).astype(f32)                                  # (N, 8)
    x = jnp.dot(onehot, vec_ref[0:VOCAB_PAD, :],
                preferred_element_type=f32) + vec_ref[PE0:PE0 + N, :]  # (N,128)

    # Lane mask over the D real features (LayerNorm statistics only).
    feat_mask = (jax.lax.broadcasted_iota(jnp.int32, (1, DP), 1) < D).astype(f32)
    # Causal additive mask built on the VPU -- no HBM operand for it.
    row = jax.lax.broadcasted_iota(jnp.int32, (S, S), 0)
    col = jax.lax.broadcasted_iota(jnp.int32, (S, S), 1)
    neg_mask = jnp.where(col > row, f32(-1e30), f32(0.0))          # (S, S)

    for l in range(NUM_LAYERS):                                    # static unroll
        wb = 4 * l * LANE
        vb = LV0 + 8 * l
        # Q/K/V projections (1/sqrt(D) folded into Wq & bq); everything stays
        # 128-lane padded, so no sub-vreg slicing anywhere.
        q = dot_w(x, wb + 0 * LANE) + vec_ref[vb + 0:vb + 1, :]
        k = dot_w(x, wb + 1 * LANE) + vec_ref[vb + 1:vb + 2, :]
        v = dot_w(x, wb + 2 * LANE) + vec_ref[vb + 2:vb + 3, :]

        q3 = q.reshape(B, S, DP).astype(bf16)
        k3 = k.reshape(B, S, DP).astype(bf16)
        v3 = v.reshape(B, S, DP).astype(bf16)
        s = jnp.einsum("bqd,bkd->bqk", q3, k3,
                       preferred_element_type=f32) + neg_mask       # (B,S,S)
        s = s - jnp.max(s, axis=-1, keepdims=True)
        p = jnp.exp(s)
        p = p / jnp.sum(p, axis=-1, keepdims=True)                  # exact divide
        attn = jnp.einsum("bqk,bkd->bqd", p.astype(bf16), v3,
                          preferred_element_type=f32).reshape(N, DP)

        out = dot_w(attn, wb + 3 * LANE) + vec_ref[vb + 3:vb + 4, :]
        gamma = vec_ref[vb + 4:vb + 5, :]
        beta = vec_ref[vb + 5:vb + 6, :]
        # LayerNorm over the D real features; padded lanes remain exactly zero
        # because gamma/beta are zero-padded.
        xr = x + out
        mu = jnp.sum(xr, axis=-1, keepdims=True) * (1.0 / D)
        c = (xr - mu) * feat_mask
        var = jnp.sum(c * c, axis=-1, keepdims=True) * (1.0 / D)
        x = c * jax.lax.rsqrt(var + 1e-5) * gamma + beta
        # TODO(synk): layer['ffn'] exists in the reference __init__ but is never
        #             applied in forward(), so it is intentionally omitted.

    h = jnp.maximum(dot_w(x, W1_OFF) + vec_ref[CLS0:CLS0 + 1, :], 0.0)
    logits = dot_w(h, W2_OFF) + vec_ref[CLS0 + 1:CLS0 + 2, :]
    o_ref[...] = logits.reshape(B, S, DP)          # lane-dense (128-wide) store


# ----------------------------- parameter plumbing ----------------------------
def sinusoidal_pe(embed_dim, max_len=MAX_SEQ_LEN):
    position = jnp.arange(0, max_len, dtype=jnp.float32)[:, None]
    div_term = jnp.exp(jnp.arange(0, embed_dim, 2, dtype=jnp.float32)
                       * (-math.log(10000.0) / embed_dim))
    pe = jnp.zeros((max_len, embed_dim), jnp.float32)
    pe = pe.at[:, 0::2].set(jnp.sin(position * div_term))
    pe = pe.at[:, 1::2].set(jnp.cos(position * div_term))
    return pe


def init_params(key):
    D, L, V = ATTN_DIM, NUM_LAYERS, VOCAB
    ks = jax.random.split(key, 10)
    s = 0.1
    return dict(
        word_emb=s * jax.random.normal(ks[0], (V, D), jnp.float32),
        inw=s * jax.random.normal(ks[1], (L, 3 * D, D), jnp.float32),
        inb=s * jax.random.normal(ks[2], (L, 3, 1, D), jnp.float32),
        outw=s * jax.random.normal(ks[3], (L, D, D), jnp.float32),
        outb=s * jax.random.normal(ks[4], (L, 1, D), jnp.float32),
        lnw=1.0 + s * jax.random.normal(ks[5], (L, 1, D), jnp.float32),
        lnb=s * jax.random.normal(ks[6], (L, 1, D), jnp.float32),
        w1=s * jax.random.normal(ks[7], (2 * D, D), jnp.float32),
        b1=s * jax.random.normal(ks[8], (1, 2 * D), jnp.float32),
        w2=s * jax.random.normal(ks[9], (V, 2 * D), jnp.float32),
        b2=jnp.zeros((1, V), jnp.float32),
    )


def _pack_params(params, B, S):
    """Trace-time layout plumbing: fold the 1/sqrt(D) scale, transpose, zero-pad
    and coalesce everything into one bf16 weight slab + one f32 vector slab."""
    D, L, V = ATTN_DIM, NUM_LAYERS, VOCAB
    N = B * S
    scale = 1.0 / math.sqrt(D)                 # single head -> head_dim == D

    # bf16 weight slab: [wq0,wk0,wv0,wo0, wq1,wk1,wv1,wo1, w1,w2] 128x128 blocks.
    w_slab = jnp.zeros((W_ROWS, LANE), jnp.float32)

    def put(slab, blk, w):                     # w already in "x @ w" orientation
        r, c = w.shape
        return slab.at[blk * LANE:blk * LANE + r, 0:c].set(w)

    for l in range(L):
        w_in = params["inw"][l]                # (3D, D), rows = [Wq; Wk; Wv]
        w_slab = put(w_slab, 4 * l + 0, (w_in[0:D] * scale).T)   # fold 1/sqrt(D)
        w_slab = put(w_slab, 4 * l + 1, w_in[D:2 * D].T)
        w_slab = put(w_slab, 4 * l + 2, w_in[2 * D:].T)
        w_slab = put(w_slab, 4 * l + 3, params["outw"][l].T)
    w_slab = put(w_slab, 4 * L + 0, params["w1"].T)              # (D, 2D)
    w_slab = put(w_slab, 4 * L + 1, params["w2"].T)              # (2D, V)
    w_slab = w_slab.astype(jnp.bfloat16)

    # f32 vector slab: emb table | tiled PE | per-layer vectors | cls biases.
    PE0 = VOCAB_PAD
    LV0 = PE0 + N
    CLS0 = LV0 + 8 * L
    rows = CLS0 + 8
    vec = jnp.zeros((rows, LANE), jnp.float32)
    vec = vec.at[0:V, 0:D].set(params["word_emb"])
    pe = sinusoidal_pe(D)[:S]                                    # (S, D)
    vec = vec.at[PE0:PE0 + N, 0:D].set(jnp.tile(pe, (B, 1)))
    for l in range(L):
        b_in = params["inb"][l].reshape(3, D)
        base = LV0 + 8 * l
        vec = vec.at[base + 0, 0:D].set(b_in[0] * scale)         # fold 1/sqrt(D)
        vec = vec.at[base + 1, 0:D].set(b_in[1])
        vec = vec.at[base + 2, 0:D].set(b_in[2])
        vec = vec.at[base + 3, 0:D].set(params["outb"][l, 0])
        vec = vec.at[base + 4, 0:D].set(params["lnw"][l, 0])
        vec = vec.at[base + 5, 0:D].set(params["lnb"][l, 0])
    vec = vec.at[CLS0, 0:2 * D].set(params["b1"][0])
    vec = vec.at[CLS0 + 1, 0:V].set(params["b2"][0])
    return w_slab, vec


# ----------------------------- wrapper ---------------------------------------
def transformer_forward(ids, params):
    B, S = ids.shape
    N = B * S
    w_slab, vec_slab = _pack_params(params, B, S)
    ids_col = ids.reshape(N, 1).astype(jnp.int32)

    # Single invocation on every TPU generation: at N=32, D=16 the kernel is
    # fixed-overhead bound, so splitting the batch over grid steps (or over
    # v7x's two TensorCores) only adds per-step / split cost (see perf review).
    padded = pl.pallas_call(
        transformer_kernel,
        out_shape=jax.ShapeDtypeStruct((B, S, LANE), jnp.float32),
        grid=(1,),
        in_specs=[
            pl.BlockSpec((N, 1), lambda i: (0, 0)),              # token ids
            pl.BlockSpec(w_slab.shape, lambda i: (0, 0)),        # bf16 weights
            pl.BlockSpec(vec_slab.shape, lambda i: (0, 0)),      # f32 vectors
        ],
        out_specs=pl.BlockSpec((B, S, LANE), lambda i: (0, 0, 0)),
        compiler_params=pltpu.CompilerParams(
            dimension_semantics=("arbitrary",)),
    )(ids_col, w_slab, vec_slab)
    return padded[..., :VOCAB]                    # slice off lane padding


# ----------------------------- pure-JAX reference ----------------------------
def _layernorm(x, w, b, eps=1e-5):
    mu = jnp.mean(x, axis=-1, keepdims=True)
    var = jnp.mean((x - mu) ** 2, axis=-1, keepdims=True)
    return (x - mu) * jax.lax.rsqrt(var + eps) * w + b


def reference_forward(ids, params):
    """Pure-JAX (f32) re-implementation of the PyTorch forward, for checking."""
    B, S = ids.shape
    D = ATTN_DIM
    x = params["word_emb"][ids] + sinusoidal_pe(D)[:S][None]
    causal = jnp.triu(jnp.ones((S, S), dtype=bool), k=1)
    mask = jnp.where(causal, -1e30, 0.0).astype(jnp.float32)
    for l in range(NUM_LAYERS):
        w_in, b_in = params["inw"][l], params["inb"][l]
        q = x @ w_in[0:D].T + b_in[0]
        k = x @ w_in[D:2 * D].T + b_in[1]
        v = x @ w_in[2 * D:].T + b_in[2]
        s = jnp.einsum("bqd,bkd->bqk", q, k) / math.sqrt(D) + mask
        p = jax.nn.softmax(s, axis=-1)
        attn = jnp.einsum("bqk,bkd->bqd", p, v)
        out = attn @ params["outw"][l].T + params["outb"][l]
        x = _layernorm(x + out, params["lnw"][l], params["lnb"][l])
    h = jnp.maximum(x @ params["w1"].T + params["b1"], 0.0)
    return h @ params["w2"].T + params["b2"]


if __name__ == "__main__":
    flip_flop_dict = {"0": 0, "1": 1, "w": 2, "r": 3, "i": 4}
    sentence = "w0w1r1i0i0r1w0r0"                    # length 16
    row0 = jnp.array([flip_flop_dict[c] for c in sentence], dtype=jnp.int32)
    key = jax.random.PRNGKey(0)
    key, k_ids = jax.random.split(key)
    row1 = jax.random.randint(k_ids, (len(sentence),), 0, VOCAB, dtype=jnp.int32)
    ids = jnp.stack([row0, row1], axis=0)            # (B=2, S=16)

    params = init_params(key)

    out = transformer_forward(ids, params)
    out = jax.block_until_ready(out)

    ref = reference_forward(ids, params)
    # Tolerance covers bf16 MXU operands (f32 accumulation, f32 LN/softmax).
    np.testing.assert_allclose(np.asarray(out), np.asarray(ref),
                               atol=2e-2, rtol=2e-2)

    assert out.shape == (2, len(sentence), VOCAB)
    print("KERNEL_OK")
</pallas_src>

<mosaic_0001>
module attributes {stable_mosaic.version = 11 : i64} {
  func.func @transformer_kernel(%arg0: i32, %arg1: memref<32x1xi32, #tpu.memory_space<vmem>>, %arg2: memref<1280x128xbf16, #tpu.memory_space<vmem>>, %arg3: memref<64x128xf32, #tpu.memory_space<vmem>>, %arg4: memref<2x16x128xf32, #tpu.memory_space<vmem>>) attributes {dimension_semantics = [#tpu.dimension_semantics<arbitrary>], iteration_bounds = array<i64: 1>, scalar_prefetch = 0 : i64, scratch_operands = 0 : i64, tpu.core_type = #tpu.core_type<tc>, window_params = [{pipeline_mode = #tpu.pipeline_mode<synchronous>, transform_indices = @transform_0, window_bounds = array<i64: 32, 1>}, {pipeline_mode = #tpu.pipeline_mode<synchronous>, transform_indices = @transform_1, window_bounds = array<i64: 1280, 128>}, {pipeline_mode = #tpu.pipeline_mode<synchronous>, transform_indices = @transform_2, window_bounds = array<i64: 64, 128>}, {pipeline_mode = #tpu.pipeline_mode<synchronous>, transform_indices = @transform_3, window_bounds = array<i64: 2, 16, 128>}]} {
    %c0 = arith.constant 0 : index
    %c0_0 = arith.constant 0 : index
    %0 = vector.load %arg1[%c0, %c0_0] : memref<32x1xi32, #tpu.memory_space<vmem>>, vector<32x1xi32>
    %1 = tpu.iota {dimensions = array<i32: 1>} : vector<32x8xi32>
    %2 = vector.broadcast %0 : vector<32x1xi32> to vector<32x8xi32>
    %3 = arith.cmpi eq, %1, %2 : vector<32x8xi32>
    %4 = arith.extui %3 : vector<32x8xi1> to vector<32x8xi32>
    %5 = arith.sitofp %4 : vector<32x8xi32> to vector<32x8xf32>
    %c0_1 = arith.constant 0 : index
    %c0_2 = arith.constant 0 : index
    %6 = vector.load %arg3[%c0_1, %c0_2] : memref<64x128xf32, #tpu.memory_space<vmem>>, vector<8x128xf32>
    %cst = arith.constant dense<0.000000e+00> : vector<32x128xf32>
    %7 = tpu.matmul %5, %6, %cst {dimension_numbers = #tpu.dot_dimension_numbers<[1], [0], [0], [1], [0, 0, 1, 1], [], []>} : vector<32x8xf32>, vector<8x128xf32>, vector<32x128xf32> -> vector<32x128xf32>
    %c8 = arith.constant 8 : index
    %c0_3 = arith.constant 0 : index
    %8 = vector.load %arg3[%c8, %c0_3] : memref<64x128xf32, #tpu.memory_space<vmem>>, vector<32x128xf32>
    %9 = arith.addf %7, %8 : vector<32x128xf32>
    %10 = tpu.iota {dimensions = array<i32: 1>} : vector<1x128xi32>
    %c16_i32 = arith.constant 16 : i32
    %11 = vector.broadcast %c16_i32 : i32 to vector<1x128xi32>
    %12 = arith.cmpi slt, %10, %11 : vector<1x128xi32>
    %13 = arith.extui %12 : vector<1x128xi1> to vector<1x128xi32>
    %14 = arith.sitofp %13 : vector<1x128xi32> to vector<1x128xf32>
    %15 = tpu.iota {dimensions = array<i32: 0>} : vector<16x16xi32>
    %16 = tpu.iota {dimensions = array<i32: 1>} : vector<16x16xi32>
    %17 = arith.cmpi sgt, %16, %15 : vector<16x16xi32>
    %cst_4 = arith.constant -1.000000e+30 : f32
    %cst_5 = arith.constant 0.000000e+00 : f32
    %18 = vector.broadcast %cst_4 : f32 to vector<16x16xf32>
    %19 = vector.broadcast %cst_5 : f32 to vector<16x16xf32>
    %20 = arith.select %17, %18, %19 : vector<16x16xi1>, vector<16x16xf32>
    %21 = arith.truncf %9 : vector<32x128xf32> to vector<32x128xbf16>
    %c0_6 = arith.constant 0 : index
    %c0_7 = arith.constant 0 : index
    %22 = vector.load %arg2[%c0_6, %c0_7] : memref<1280x128xbf16, #tpu.memory_space<vmem>>, vector<128x128xbf16>
    %cst_8 = arith.constant dense<0.000000e+00> : vector<32x128xf32>
    %23 = tpu.matmul %21, %22, %cst_8 {dimension_numbers = #tpu.dot_dimension_numbers<[1], [0], [0], [1], [0, 0, 1, 1], [], []>} : vector<32x128xbf16>, vector<128x128xbf16>, vector<32x128xf32> -> vector<32x128xf32>
    %c40 = arith.constant 40 : index
    %c0_9 = arith.constant 0 : index
    %24 = vector.load %arg3[%c40, %c0_9] : memref<64x128xf32, #tpu.memory_space<vmem>>, vector<1x128xf32>
    %25 = vector.broadcast %24 : vector<1x128xf32> to vector<32x128xf32>
    %26 = arith.addf %23, %25 : vector<32x128xf32>
    %27 = arith.truncf %9 : vector<32x128xf32> to vector<32x128xbf16>
    %c128 = arith.constant 128 : index
    %c0_10 = arith.constant 0 : index
    %28 = vector.load %arg2[%c128, %c0_10] : memref<1280x128xbf16, #tpu.memory_space<vmem>>, vector<128x128xbf16>
    %cst_11 = arith.constant dense<0.000000e+00> : vector<32x128xf32>
    %29 = tpu.matmul %27, %28, %cst_11 {dimension_numbers = #tpu.dot_dimension_numbers<[1], [0], [0], [1], [0, 0, 1, 1], [], []>} : vector<32x128xbf16>, vector<128x128xbf16>, vector<32x128xf32> -> vector<32x128xf32>
    %c41 = arith.constant 41 : index
    %c0_12 = arith.constant 0 : index
    %30 = vector.load %arg3[%c41, %c0_12] : memref<64x128xf32, #tpu.memory_space<vmem>>, vector<1x128xf32>
    %31 = vector.broadcast %30 : vector<1x128xf32> to vector<32x128xf32>
    %32 = arith.addf %29, %31 : vector<32x128xf32>
    %33 = arith.truncf %9 : vector<32x128xf32> to vector<32x128xbf16>
    %c256 = arith.constant 256 : index
    %c0_13 = arith.constant 0 : index
    %34 = vector.load %arg2[%c256, %c0_13] : memref<1280x128xbf16, #tpu.memory_space<vmem>>, vector<128x128xbf16>
    %cst_14 = arith.constant dense<0.000000e+00> : vector<32x128xf32>
    %35 = tpu.matmul %33, %34, %cst_14 {dimension_numbers = #tpu.dot_dimension_numbers<[1], [0], [0], [1], [0, 0, 1, 1], [], []>} : vector<32x128xbf16>, vector<128x128xbf16>, vector<32x128xf32> -> vector<32x128xf32>
    %c42 = arith.constant 42 : index
    %c0_15 = arith.constant 0 : index
    %36 = vector.load %arg3[%c42, %c0_15] : memref<64x128xf32, #tpu.memory_space<vmem>>, vector<1x128xf32>
    %37 = vector.broadcast %36 : vector<1x128xf32> to vector<32x128xf32>
    %38 = arith.addf %35, %37 : vector<32x128xf32>
    %39 = vector.shape_cast %26 : vector<32x128xf32> to vector<2x16x128xf32>
    %40 = arith.truncf %39 : vector<2x16x128xf32> to vector<2x16x128xbf16>
    %41 = vector.shape_cast %32 : vector<32x128xf32> to vector<2x16x128xf32>
    %42 = arith.truncf %41 : vector<2x16x128xf32> to vector<2x16x128xbf16>
    %43 = vector.shape_cast %38 : vector<32x128xf32> to vector<2x16x128xf32>
    %44 = arith.truncf %43 : vector<2x16x128xf32> to vector<2x16x128xbf16>
    "tpu.trace_start"() <{level = 10 : i32, message = "bqd,bkd->bqk"}> : () -> ()
    %cst_16 = arith.constant dense<0.000000e+00> : vector<2x16x16xf32>
    %45 = tpu.matmul %40, %42, %cst_16 {dimension_numbers = #tpu.dot_dimension_numbers<[2], [2], [1], [1], [0, 0, 0, 1, 1, 1], [0], [0]>} : vector<2x16x128xbf16>, vector<2x16x128xbf16>, vector<2x16x16xf32> -> vector<2x16x16xf32>
    "tpu.trace_stop"() : () -> ()
    %46 = vector.shape_cast %20 : vector<16x16xf32> to vector<1x16x16xf32>
    %47 = vector.broadcast %46 : vector<1x16x16xf32> to vector<2x16x16xf32>
    %48 = arith.addf %45, %47 : vector<2x16x16xf32>
    %cst_17 = arith.constant dense<0xFF800000> : vector<2x16xf32>
    %49 = vector.multi_reduction <maximumf>, %48, %cst_17 [2] : vector<2x16x16xf32> to vector<2x16xf32>
    %50 = vector.shape_cast %49 : vector<2x16xf32> to vector<2x16x1xf32>
    %51 = vector.broadcast %50 : vector<2x16x1xf32> to vector<2x16x16xf32>
    %52 = arith.subf %48, %51 : vector<2x16x16xf32>
    %53 = math.exp %52 : vector<2x16x16xf32>
    %cst_18 = arith.constant dense<0.000000e+00> : vector<2x16xf32>
    %54 = vector.multi_reduction <add>, %53, %cst_18 [2] : vector<2x16x16xf32> to vector<2x16xf32>
    %55 = vector.shape_cast %54 : vector<2x16xf32> to vector<2x16x1xf32>
    %56 = vector.broadcast %55 : vector<2x16x1xf32> to vector<2x16x16xf32>
    %57 = arith.divf %53, %56 : vector<2x16x16xf32>
    %58 = arith.truncf %57 : vector<2x16x16xf32> to vector<2x16x16xbf16>
    "tpu.trace_start"() <{level = 10 : i32, message = "bqk,bkd->bqd"}> : () -> ()
    %cst_19 = arith.constant dense<0.000000e+00> : vector<2x16x128xf32>
    %59 = tpu.matmul %58, %44, %cst_19 {dimension_numbers = #tpu.dot_dimension_numbers<[2], [1], [1], [2], [0, 0, 0, 1, 1, 2], [0], [0]>} : vector<2x16x16xbf16>, vector<2x16x128xbf16>, vector<2x16x128xf32> -> vector<2x16x128xf32>
    "tpu.trace_stop"() : () -> ()
    %60 = vector.shape_cast %59 : vector<2x16x128xf32> to vector<32x128xf32>
    %61 = arith.truncf %60 : vector<32x128xf32> to vector<32x128xbf16>
    %c384 = arith.constant 384 : index
    %c0_20 = arith.constant 0 : index
    %62 = vector.load %arg2[%c384, %c0_20] : memref<1280x128xbf16, #tpu.memory_space<vmem>>, vector<128x128xbf16>
    %cst_21 = arith.constant dense<0.000000e+00> : vector<32x128xf32>
    %63 = tpu.matmul %61, %62, %cst_21 {dimension_numbers = #tpu.dot_dimension_numbers<[1], [0], [0], [1], [0, 0, 1, 1], [], []>} : vector<32x128xbf16>, vector<128x128xbf16>, vector<32x128xf32> -> vector<32x128xf32>
    %c43 = arith.constant 43 : index
    %c0_22 = arith.constant 0 : index
    %64 = vector.load %arg3[%c43, %c0_22] : memref<64x128xf32, #tpu.memory_space<vmem>>, vector<1x128xf32>
    %65 = vector.broadcast %64 : vector<1x128xf32> to vector<32x128xf32>
    %66 = arith.addf %63, %65 : vector<32x128xf32>
    %c44 = arith.constant 44 : index
    %c0_23 = arith.constant 0 : index
    %67 = vector.load %arg3[%c44, %c0_23] : memref<64x128xf32, #tpu.memory_space<vmem>>, vector<1x128xf32>
    %c45 = arith.constant 45 : index
    %c0_24 = arith.constant 0 : index
    %68 = vector.load %arg3[%c45, %c0_24] : memref<64x128xf32, #tpu.memory_space<vmem>>, vector<1x128xf32>
    %69 = arith.addf %9, %66 : vector<32x128xf32>
    %cst_25 = arith.constant dense<0.000000e+00> : vector<32xf32>
    %70 = vector.multi_reduction <add>, %69, %cst_25 [1] : vector<32x128xf32> to vector<32xf32>
    %71 = vector.shape_cast %70 : vector<32xf32> to vector<32x1xf32>
    %cst_26 = arith.constant 6.250000e-02 : f32
    %72 = vector.broadcast %cst_26 : f32 to vector<32x1xf32>
    %73 = arith.mulf %71, %72 : vector<32x1xf32>
    %74 = vector.broadcast %73 : vector<32x1xf32> to vector<32x128xf32>
    %75 = arith.subf %69, %74 : vector<32x128xf32>
    %76 = vector.broadcast %14 : vector<1x128xf32> to vector<32x128xf32>
    %77 = arith.mulf %75, %76 : vector<32x128xf32>
    %78 = arith.mulf %77, %77 : vector<32x128xf32>
    %cst_27 = arith.constant dense<0.000000e+00> : vector<32xf32>
    %79 = vector.multi_reduction <add>, %78, %cst_27 [1] : vector<32x128xf32> to vector<32xf32>
    %80 = vector.shape_cast %79 : vector<32xf32> to vector<32x1xf32>
    %cst_28 = arith.constant 6.250000e-02 : f32
    %81 = vector.broadcast %cst_28 : f32 to vector<32x1xf32>
    %82 = arith.mulf %80, %81 : vector<32x1xf32>
    %cst_29 = arith.constant 9.99999974E-6 : f32
    %83 = vector.broadcast %cst_29 : f32 to vector<32x1xf32>
    %84 = arith.addf %82, %83 : vector<32x1xf32>
    %85 = math.rsqrt %84 : vector<32x1xf32>
    %86 = vector.broadcast %85 : vector<32x1xf32> to vector<32x128xf32>
    %87 = arith.mulf %77, %86 : vector<32x128xf32>
    %88 = vector.broadcast %67 : vector<1x128xf32> to vector<32x128xf32>
    %89 = arith.mulf %87, %88 : vector<32x128xf32>
    %90 = vector.broadcast %68 : vector<1x128xf32> to vector<32x128xf32>
    %91 = arith.addf %89, %90 : vector<32x128xf32>
    %92 = arith.truncf %91 : vector<32x128xf32> to vector<32x128xbf16>
    %c512 = arith.constant 512 : index
    %c0_30 = arith.constant 0 : index
    %93 = vector.load %arg2[%c512, %c0_30] : memref<1280x128xbf16, #tpu.memory_space<vmem>>, vector<128x128xbf16>
    %cst_31 = arith.constant dense<0.000000e+00> : vector<32x128xf32>
    %94 = tpu.matmul %92, %93, %cst_31 {dimension_numbers = #tpu.dot_dimension_numbers<[1], [0], [0], [1], [0, 0, 1, 1], [], []>} : vector<32x128xbf16>, vector<128x128xbf16>, vector<32x128xf32> -> vector<32x128xf32>
    %c48 = arith.constant 48 : index
    %c0_32 = arith.constant 0 : index
    %95 = vector.load %arg3[%c48, %c0_32] : memref<64x128xf32, #tpu.memory_space<vmem>>, vector<1x128xf32>
    %96 = vector.broadcast %95 : vector<1x128xf32> to vector<32x128xf32>
    %97 = arith.addf %94, %96 : vector<32x128xf32>
    %98 = arith.truncf %91 : vector<32x128xf32> to vector<32x128xbf16>
    %c640 = arith.constant 640 : index
    %c0_33 = arith.constant 0 : index
    %99 = vector.load %arg2[%c640, %c0_33] : memref<1280x128xbf16, #tpu.memory_space<vmem>>, vector<128x128xbf16>
    %cst_34 = arith.constant dense<0.000000e+00> : vector<32x128xf32>
    %100 = tpu.matmul %98, %99, %cst_34 {dimension_numbers = #tpu.dot_dimension_numbers<[1], [0], [0], [1], [0, 0, 1, 1], [], []>} : vector<32x128xbf16>, vector<128x128xbf16>, vector<32x128xf32> -> vector<32x128xf32>
    %c49 = arith.constant 49 : index
    %c0_35 = arith.constant 0 : index
    %101 = vector.load %arg3[%c49, %c0_35] : memref<64x128xf32, #tpu.memory_space<vmem>>, vector<1x128xf32>
    %102 = vector.broadcast %101 : vector<1x128xf32> to vector<32x128xf32>
    %103 = arith.addf %100, %102 : vector<32x128xf32>
    %104 = arith.truncf %91 : vector<32x128xf32> to vector<32x128xbf16>
    %c768 = arith.constant 768 : index
    %c0_36 = arith.constant 0 : index
    %105 = vector.load %arg2[%c768, %c0_36] : memref<1280x128xbf16, #tpu.memory_space<vmem>>, vector<128x128xbf16>
    %cst_37 = arith.constant dense<0.000000e+00> : vector<32x128xf32>
    %106 = tpu.matmul %104, %105, %cst_37 {dimension_numbers = #tpu.dot_dimension_numbers<[1], [0], [0], [1], [0, 0, 1, 1], [], []>} : vector<32x128xbf16>, vector<128x128xbf16>, vector<32x128xf32> -> vector<32x128xf32>
    %c50 = arith.constant 50 : index
    %c0_38 = arith.constant 0 : index
    %107 = vector.load %arg3[%c50, %c0_38] : memref<64x128xf32, #tpu.memory_space<vmem>>, vector<1x128xf32>
    %108 = vector.broadcast %107 : vector<1x128xf32> to vector<32x128xf32>
    %109 = arith.addf %106, %108 : vector<32x128xf32>
    %110 = vector.shape_cast %97 : vector<32x128xf32> to vector<2x16x128xf32>
    %111 = arith.truncf %110 : vector<2x16x128xf32> to vector<2x16x128xbf16>
    %112 = vector.shape_cast %103 : vector<32x128xf32> to vector<2x16x128xf32>
    %113 = arith.truncf %112 : vector<2x16x128xf32> to vector<2x16x128xbf16>
    %114 = vector.shape_cast %109 : vector<32x128xf32> to vector<2x16x128xf32>
    %115 = arith.truncf %114 : vector<2x16x128xf32> to vector<2x16x128xbf16>
    "tpu.trace_start"() <{level = 10 : i32, message = "bqd,bkd->bqk"}> : () -> ()
    %cst_39 = arith.constant dense<0.000000e+00> : vector<2x16x16xf32>
    %116 = tpu.matmul %111, %113, %cst_39 {dimension_numbers = #tpu.dot_dimension_numbers<[2], [2], [1], [1], [0, 0, 0, 1, 1, 1], [0], [0]>} : vector<2x16x128xbf16>, vector<2x16x128xbf16>, vector<2x16x16xf32> -> vector<2x16x16xf32>
    "tpu.trace_stop"() : () -> ()
    %117 = vector.shape_cast %20 : vector<16x16xf32> to vector<1x16x16xf32>
    %118 = vector.broadcast %117 : vector<1x16x16xf32> to vector<2x16x16xf32>
    %119 = arith.addf %116, %118 : vector<2x16x16xf32>
    %cst_40 = arith.constant dense<0xFF800000> : vector<2x16xf32>
    %120 = vector.multi_reduction <maximumf>, %119, %cst_40 [2] : vector<2x16x16xf32> to vector<2x16xf32>
    %121 = vector.shape_cast %120 : vector<2x16xf32> to vector<2x16x1xf32>
    %122 = vector.broadcast %121 : vector<2x16x1xf32> to vector<2x16x16xf32>
    %123 = arith.subf %119, %122 : vector<2x16x16xf32>
    %124 = math.exp %123 : vector<2x16x16xf32>
    %cst_41 = arith.constant dense<0.000000e+00> : vector<2x16xf32>
    %125 = vector.multi_reduction <add>, %124, %cst_41 [2] : vector<2x16x16xf32> to vector<2x16xf32>
    %126 = vector.shape_cast %125 : vector<2x16xf32> to vector<2x16x1xf32>
    %127 = vector.broadcast %126 : vector<2x16x1xf32> to vector<2x16x16xf32>
    %128 = arith.divf %124, %127 : vector<2x16x16xf32>
    %129 = arith.truncf %128 : vector<2x16x16xf32> to vector<2x16x16xbf16>
    "tpu.trace_start"() <{level = 10 : i32, message = "bqk,bkd->bqd"}> : () -> ()
    %cst_42 = arith.constant dense<0.000000e+00> : vector<2x16x128xf32>
    %130 = tpu.matmul %129, %115, %cst_42 {dimension_numbers = #tpu.dot_dimension_numbers<[2], [1], [1], [2], [0, 0, 0, 1, 1, 2], [0], [0]>} : vector<2x16x16xbf16>, vector<2x16x128xbf16>, vector<2x16x128xf32> -> vector<2x16x128xf32>
    "tpu.trace_stop"() : () -> ()
    %131 = vector.shape_cast %130 : vector<2x16x128xf32> to vector<32x128xf32>
    %132 = arith.truncf %131 : vector<32x128xf32> to vector<32x128xbf16>
    %c896 = arith.constant 896 : index
    %c0_43 = arith.constant 0 : index
    %133 = vector.load %arg2[%c896, %c0_43] : memref<1280x128xbf16, #tpu.memory_space<vmem>>, vector<128x128xbf16>
    %cst_44 = arith.constant dense<0.000000e+00> : vector<32x128xf32>
    %134 = tpu.matmul %132, %133, %cst_44 {dimension_numbers = #tpu.dot_dimension_numbers<[1], [0], [0], [1], [0, 0, 1, 1], [], []>} : vector<32x128xbf16>, vector<128x128xbf16>, vector<32x128xf32> -> vector<32x128xf32>
    %c51 = arith.constant 51 : index
    %c0_45 = arith.constant 0 : index
    %135 = vector.load %arg3[%c51, %c0_45] : memref<64x128xf32, #tpu.memory_space<vmem>>, vector<1x128xf32>
    %136 = vector.broadcast %135 : vector<1x128xf32> to vector<32x128xf32>
    %137 = arith.addf %134, %136 : vector<32x128xf32>
    %c52 = arith.constant 52 : index
    %c0_46 = arith.constant 0 : index
    %138 = vector.load %arg3[%c52, %c0_46] : memref<64x128xf32, #tpu.memory_space<vmem>>, vector<1x128xf32>
    %c53 = arith.constant 53 : index
    %c0_47 = arith.constant 0 : index
    %139 = vector.load %arg3[%c53, %c0_47] : memref<64x128xf32, #tpu.memory_space<vmem>>, vector<1x128xf32>
    %140 = arith.addf %91, %137 : vector<32x128xf32>
    %cst_48 = arith.constant dense<0.000000e+00> : vector<32xf32>
    %141 = vector.multi_reduction <add>, %140, %cst_48 [1] : vector<32x128xf32> to vector<32xf32>
    %142 = vector.shape_cast %141 : vector<32xf32> to vector<32x1xf32>
    %cst_49 = arith.constant 6.250000e-02 : f32
    %143 = vector.broadcast %cst_49 : f32 to vector<32x1xf32>
    %144 = arith.mulf %142, %143 : vector<32x1xf32>
    %145 = vector.broadcast %144 : vector<32x1xf32> to vector<32x128xf32>
    %146 = arith.subf %140, %145 : vector<32x128xf32>
    %147 = vector.broadcast %14 : vector<1x128xf32> to vector<32x128xf32>
    %148 = arith.mulf %146, %147 : vector<32x128xf32>
    %149 = arith.mulf %148, %148 : vector<32x128xf32>
    %cst_50 = arith.constant dense<0.000000e+00> : vector<32xf32>
    %150 = vector.multi_reduction <add>, %149, %cst_50 [1] : vector<32x128xf32> to vector<32xf32>
    %151 = vector.shape_cast %150 : vector<32xf32> to vector<32x1xf32>
    %cst_51 = arith.constant 6.250000e-02 : f32
    %152 = vector.broadcast %cst_51 : f32 to vector<32x1xf32>
    %153 = arith.mulf %151, %152 : vector<32x1xf32>
    %cst_52 = arith.constant 9.99999974E-6 : f32
    %154 = vector.broadcast %cst_52 : f32 to vector<32x1xf32>
    %155 = arith.addf %153, %154 : vector<32x1xf32>
    %156 = math.rsqrt %155 : vector<32x1xf32>
    %157 = vector.broadcast %156 : vector<32x1xf32> to vector<32x128xf32>
    %158 = arith.mulf %148, %157 : vector<32x128xf32>
    %159 = vector.broadcast %138 : vector<1x128xf32> to vector<32x128xf32>
    %160 = arith.mulf %158, %159 : vector<32x128xf32>
    %161 = vector.broadcast %139 : vector<1x128xf32> to vector<32x128xf32>
    %162 = arith.addf %160, %161 : vector<32x128xf32>
    %163 = arith.truncf %162 : vector<32x128xf32> to vector<32x128xbf16>
    %c1024 = arith.constant 1024 : index
    %c0_53 = arith.constant 0 : index
    %164 = vector.load %arg2[%c1024, %c0_53] : memref<1280x128xbf16, #tpu.memory_space<vmem>>, vector<128x128xbf16>
    %cst_54 = arith.constant dense<0.000000e+00> : vector<32x128xf32>
    %165 = tpu.matmul %163, %164, %cst_54 {dimension_numbers = #tpu.dot_dimension_numbers<[1], [0], [0], [1], [0, 0, 1, 1], [], []>} : vector<32x128xbf16>, vector<128x128xbf16>, vector<32x128xf32> -> vector<32x128xf32>
    %c56 = arith.constant 56 : index
    %c0_55 = arith.constant 0 : index
    %166 = vector.load %arg3[%c56, %c0_55] : memref<64x128xf32, #tpu.memory_space<vmem>>, vector<1x128xf32>
    %167 = vector.broadcast %166 : vector<1x128xf32> to vector<32x128xf32>
    %168 = arith.addf %165, %167 : vector<32x128xf32>
    %cst_56 = arith.constant 0.000000e+00 : f32
    %169 = vector.broadcast %cst_56 : f32 to vector<32x128xf32>
    %170 = arith.maximumf %168, %169 : vector<32x128xf32>
    %171 = arith.truncf %170 : vector<32x128xf32> to vector<32x128xbf16>
    %c1152 = arith.constant 1152 : index
    %c0_57 = arith.constant 0 : index
    %172 = vector.load %arg2[%c1152, %c0_57] : memref<1280x128xbf16, #tpu.memory_space<vmem>>, vector<128x128xbf16>
    %cst_58 = arith.constant dense<0.000000e+00> : vector<32x128xf32>
    %173 = tpu.matmul %171, %172, %cst_58 {dimension_numbers = #tpu.dot_dimension_numbers<[1], [0], [0], [1], [0, 0, 1, 1], [], []>} : vector<32x128xbf16>, vector<128x128xbf16>, vector<32x128xf32> -> vector<32x128xf32>
    %c57 = arith.constant 57 : index
    %c0_59 = arith.constant 0 : index
    %174 = vector.load %arg3[%c57, %c0_59] : memref<64x128xf32, #tpu.memory_space<vmem>>, vector<1x128xf32>
    %175 = vector.broadcast %174 : vector<1x128xf32> to vector<32x128xf32>
    %176 = arith.addf %173, %175 : vector<32x128xf32>
    %177 = vector.shape_cast %176 : vector<32x128xf32> to vector<2x16x128xf32>
    %c0_60 = arith.constant 0 : index
    %c0_61 = arith.constant 0 : index
    %c0_62 = arith.constant 0 : index
    %178 = vector.load %arg4[%c0_60, %c0_61, %c0_62] : memref<2x16x128xf32, #tpu.memory_space<vmem>>, vector<2x16x128xf32>
    tpu.vector_store %arg4[%c0_60, %c0_61, %c0_62], %177 {strides = array<i32>} : memref<2x16x128xf32, #tpu.memory_space<vmem>>, vector<2x16x128xf32>,
    return
  }
  func.func @transform_0(%arg0: i32) -> (i32, i32) {
    %c0_i32 = arith.constant 0 : i32
    %c0_i32_0 = arith.constant 0 : i32
    %c0_i32_1 = arith.constant 0 : i32
    return %c0_i32, %c0_i32_0 : i32, i32
  }
  func.func @transform_1(%arg0: i32) -> (i32, i32) {
    %c0_i32 = arith.constant 0 : i32
    %c0_i32_0 = arith.constant 0 : i32
    %c0_i32_1 = arith.constant 0 : i32
    return %c0_i32, %c0_i32_0 : i32, i32
  }
  func.func @transform_2(%arg0: i32) -> (i32, i32) {
    %c0_i32 = arith.constant 0 : i32
    %c0_i32_0 = arith.constant 0 : i32
    %c0_i32_1 = arith.constant 0 : i32
    return %c0_i32, %c0_i32_0 : i32, i32
  }
  func.func @transform_3(%arg0: i32) -> (i32, i32, i32) {
    %c0_i32 = arith.constant 0 : i32
    %c0_i32_0 = arith.constant 0 : i32
    %c0_i32_1 = arith.constant 0 : i32
    %c0_i32_2 = arith.constant 0 : i32
    return %c0_i32, %c0_i32_0, %c0_i32_1 : i32, i32, i32
  }
}

</mosaic_0001>

<llo_original>
// kernel: tpu_custom_call.1
$region0: #{tpu_custom_call.1}
  #allocation0 [shape = 'u32[]', space=smem, size = 0x4, offset = 0x4, fixed_abs, tag = 'smem constant byte address 0x4 - core index']
  #allocation1 [shape = 'u32[144,128]{1,0:T(1,128)}', space=vmem, size = 0x12000, scoped, tag = 'internal scratch']
  %s0 = inlined_call_operand.vmem [shape: s32[32,1], index: 0, kind: input, shape index: {}]
  %s1 = inlined_call_operand.hbm [shape: bf16[1280,128], index: 1, kind: input, shape index: {}]
  %s2 = inlined_call_operand.hbm [shape: f32[64,128], index: 2, kind: input, shape index: {}]
  %s3 = inlined_call_operand.hbm [shape: f32[2,16,128], index: 3, kind: output, shape index: {}]
  %s4 = sld [smem:[#allocation0]]
  $region30: #{tpu_custom_call.1} parent=0
    _
  %s6 = ssub.s32 1, %s4
  %s7 = scalar_select 0, %s6, %s4
  $region1: #{tpu_custom_call.1} parent=0
    #allocation2 [shape = 'u8[327680]{0}', space=vmem, size = 0x50000, scoped, tag = 'input window, operand 1, single buffered']
    #allocation3 [shape = 's32[1]{0}', space=sflag, size = 0x4, scoped, tag = 'scoped memory for tpu_custom_call.1']
    #allocation4 [shape = 's32[1]{0}', space=sflag, size = 0x4, scoped, tag = 'scoped memory for tpu_custom_call.1']
    #allocation5 [shape = 'u8[32768]{0}', space=vmem, size = 0x8000, scoped, tag = 'input window, operand 2, single buffered']
    #allocation6 [shape = 's32[1]{0}', space=sflag, size = 0x4, scoped, tag = 'scoped memory for tpu_custom_call.1']
    #allocation7 [shape = 'u8[16384]{0}', space=vmem, size = 0x4000, scoped, tag = 'output window, operand 0, single buffered']
    %8 = vsyncpa [#allocation3], 0
    %9 = vsyncpa [#allocation6], 0
    %10 = vsyncpa [#allocation4], 0
    // Predicated region
    $region2: #{tpu_custom_call.1} parent=1 // pred_check
      _
    $region3: #{tpu_custom_call.1} parent=1 // pred_check_branch
      %12 = sbr.rel (0) target = $region5
    $region4: #{tpu_custom_call.1} parent=1 // pred_region
      _
    $region5: #{tpu_custom_call.1} parent=1 // pred_fallthru
      _
    // Predicated region
    $region6: #{tpu_custom_call.1} parent=1 // pred_check
      _
    $region7: #{tpu_custom_call.1} parent=1 // pred_check_branch
      %14 = sbr.rel (0) target = $region9
    $region8: #{tpu_custom_call.1} parent=1 // pred_region
      %s16 = ssub.s32 10240, 10240
      %17 = vsyncadd [#allocation3], %s16
      %s18 = sshll.u32 [#allocation2], 4
      %s19 = int_to_ptr.vmem [resolvable:$true] %s18
      %24 = dma.hbm_to_vmem [thread:$0]  %s1, 10240, %s19, [#allocation3], 64, 64, 4
    $region9: #{tpu_custom_call.1} parent=1 // pred_fallthru
      _
    // Predicated region
    $region10: #{tpu_custom_call.1} parent=1 // pred_check
      _
    $region11: #{tpu_custom_call.1} parent=1 // pred_check_branch
      %26 = sbr.rel (0) target = $region13
    $region12: #{tpu_custom_call.1} parent=1 // pred_region
      %s28 = ssub.s32 1024, 1024
      %29 = vsyncadd [#allocation6], %s28
      %s30 = sshll.u32 [#allocation5], 4
      %s31 = int_to_ptr.vmem [resolvable:$true] %s30
      %36 = dma.hbm_to_vmem [thread:$0]  %s2, 1024, %s31, [#allocation6], 128, 128, 8
    $region13: #{tpu_custom_call.1} parent=1 // pred_fallthru
      _
    // Predicated region
    $region14: #{tpu_custom_call.1} parent=1 // pred_check
      _
    $region15: #{tpu_custom_call.1} parent=1 // pred_check_branch
      %38 = sbr.rel (0) target = $region17
    $region16: #{tpu_custom_call.1} parent=1 // pred_region
      %39 = dma.done [#allocation3], 10240
    $region17: #{tpu_custom_call.1} parent=1 // pred_fallthru
      _
    // Predicated region
    $region18: #{tpu_custom_call.1} parent=1 // pred_check
      _
    $region19: #{tpu_custom_call.1} parent=1 // pred_check_branch
      %41 = sbr.rel (0) target = $region21
    $region20: #{tpu_custom_call.1} parent=1 // pred_region
      %42 = dma.done [#allocation6], 1024
    $region21: #{tpu_custom_call.1} parent=1 // pred_fallthru
      _
    %v44 = vld [vmem:[%s0] sm:$0xff]
    %v45 = vld [vmem:[%s0 + $0x8] sm:$0xff]
    %v46 = vld [vmem:[%s0 + $0x10] sm:$0xff]
    %v47 = vld [vmem:[%s0 + $0x18] sm:$0xff]
    %v48 = vlaneseq
    %v49 = vand.u32 %v48, 127
    %50 = vset.pattern.permute.xlu0 0
    %51 = vperm.xlu0 %50, %v44
    %v52 = vpop.permute.xlu0 %51
    %53 = vset.pattern.permute.xlu0 0
    %54 = vperm.xlu0 %53, %v45
    %v55 = vpop.permute.xlu0 %54
    %56 = vset.pattern.permute.xlu0 0
    %57 = vperm.xlu0 %56, %v46
    %v58 = vpop.permute.xlu0 %57
    %59 = vset.pattern.permute.xlu0 0
    %60 = vperm.xlu0 %59, %v47
    %v61 = vpop.permute.xlu0 %60
    %vm62 = vcmp.eq.s32.totalorder %v49, %v52
    %vm63 = vcmp.eq.s32.totalorder %v49, %v55
    %vm64 = vcmp.eq.s32.totalorder %v49, %v58
    %vm65 = vcmp.eq.s32.totalorder %v49, %v61
    %v66 = vsel %vm62, 1, 0
    %v67 = vsel %vm63, 1, 0
    %v68 = vsel %vm64, 1, 0
    %v69 = vsel %vm65, 1, 0
    %v70 = vcvt.s32.f32 %v66
    %v71 = vcvt.s32.f32 %v67
    %v72 = vcvt.s32.f32 %v68
    %v73 = vcvt.s32.f32 %v69
    %v74 = vld [vmem:[#allocation5] sm:$0xff]
    %v75 = vld [vmem:[#allocation5 + $0x8] sm:$0xff]
    %v76 = vld [vmem:[#allocation5 + $0x10] sm:$0xff]
    %v77 = vld [vmem:[#allocation5 + $0x18] sm:$0xff]
    %v78 = vld [vmem:[#allocation5 + $0x20] sm:$0xff]
    %vm79 = vcmask 64512
    %v81 = vsel %vm79, %v70, 0
    %v84 = vsel %vm79, %v71, 0
    %v87 = vsel %vm79, %v72, 0
    %v90 = vsel %vm79, %v73, 0
    %92 = vmatprep.subr.mxu0 0.0
    %93 = vmatpush1.msra.mxu0 %v74
    %94 = vmatprep.subr.mxu0 0.0
    %95 = vmatpush1.msra.mxu0 0.0
    %96 = vmatprep.subr.mxu0 0.0
    %97 = vmatpush1.msra.mxu0 0.0
    %98 = vmatprep.subr.mxu0 0.0
    %99 = vmatpush1.msra.mxu0 0.0
    %100 = vmatprep.subr.mxu0 0.0
    %101 = vmatpush1.msra.mxu0 0.0
    %102 = vmatprep.subr.mxu0 0.0
    %103 = vmatpush1.msra.mxu0 0.0
    %104 = vmatprep.subr.mxu0 0.0
    %105 = vmatpush1.msra.mxu0 0.0
    %106 = vmatprep.subr.mxu0 0.0
    %107 = vmatpush1.msra.mxu0 0.0
    %108 = vmatprep.subr.mxu0 0.0
    %109 = vmatpush1.msra.mxu0 0.0
    %110 = vmatprep.subr.mxu0 0.0
    %111 = vmatpush1.msra.mxu0 0.0
    %112 = vmatprep.subr.mxu0 0.0
    %113 = vmatpush1.msra.mxu0 0.0
    %114 = vmatprep.subr.mxu0 0.0
    %115 = vmatpush1.msra.mxu0 0.0
    %116 = vmatprep.subr.mxu0 0.0
    %117 = vmatpush1.msra.mxu0 0.0
    %118 = vmatprep.subr.mxu0 0.0
    %119 = vmatpush1.msra.mxu0 0.0
    %120 = vmatprep.subr.mxu0 0.0
    %121 = vmatpush1.msra.mxu0 0.0
    %122 = vmatprep.subr.mxu0 0.0
    %123 = vmatpush1.msra.mxu0 0.0
    %124 = vmatprep.subr.mxu0 0.0
    %125 = vmatpush1.msra.mxu0 0.0
    %126 = vmatprep.subr.mxu0 0.0
    %127 = vmatpush1.msra.mxu0 0.0
    %128 = vmatprep.subr.mxu0 0.0
    %129 = vmatpush1.msra.mxu0 0.0
    %130 = vmatprep.subr.mxu0 0.0
    %131 = vmatpush1.msra.mxu0 0.0
    %132 = vmatprep.subr.mxu0 0.0
    %133 = vmatpush1.msra.mxu0 0.0
    %134 = vmatprep.subr.mxu0 0.0
    %135 = vmatpush1.msra.mxu0 0.0
    %136 = vmatprep.subr.mxu0 0.0
    %137 = vmatpush1.msra.mxu0 0.0
    %138 = vmatprep.subr.mxu0 0.0
    %139 = vmatpush1.msra.mxu0 0.0
    %140 = vmatprep.subr.mxu0 0.0
    %141 = vmatpush1.msra.mxu0 0.0
    %142 = vmatprep.subr.mxu0 0.0
    %143 = vmatpush1.msra.mxu0 0.0
    %144 = vmatprep.subr.mxu0 0.0
    %145 = vmatpush1.msra.mxu0 0.0
    %146 = vmatprep.subr.mxu0 0.0
    %147 = vmatpush1.msra.mxu0 0.0
    %148 = vmatprep.subr.mxu0 0.0
    %149 = vmatpush1.msra.mxu0 0.0
    %150 = vmatprep.subr.mxu0 0.0
    %151 = vmatpush1.msra.mxu0 0.0
    %152 = vmatprep.subr.mxu0 0.0
    %153 = vmatpush1.msra.mxu0 0.0
    %154 = vmatprep.subr.mxu0 0.0
    %155 = vmatpush1.msra.mxu0 0.0
    %156 = vmatprep.mubr.f32.mxu0 0.0
    %157 = vmatmul.mubr.f32.gmra.mrb[0].mxu0 %v81
    %v158 = vpop.f32.mrb[0].mxu0
    %v159 = vadd.f32 %v75, %v158
    %v160 = vpop.f32.mrb[0].mxu0
    %161 = vmatprep.mubr.f32.mxu0 0.0
    %162 = vmatmul.mubr.f32.gmra.mrb[0].mxu0 %v84
    %v163 = vpop.f32.mrb[0].mxu0
    %v164 = vadd.f32 %v76, %v163
    %v165 = vpop.f32.mrb[0].mxu0
    %166 = vmatprep.mubr.f32.mxu0 0.0
    %167 = vmatmul.mubr.f32.gmra.mrb[0].mxu0 %v87
    %v168 = vpop.f32.mrb[0].mxu0
    %v169 = vadd.f32 %v77, %v168
    %v170 = vpop.f32.mrb[0].mxu0
    %171 = vmatprep.mubr.f32.mxu0 0.0
    %172 = vmatmul.mubr.f32.gmra.mrb[0].mxu0 %v90
    %v173 = vpop.f32.mrb[0].mxu0
    %v174 = vadd.f32 %v78, %v173
    %v175 = vpop.f32.mrb[0].mxu0
    %176 = vdwg.mxu0
    %vm177 = vcmp.lt.s32.totalorder %v49, 16
    %v178 = vsel %vm177, 1, 0
    %v179 = vcvt.s32.f32 %v178
    %v180 = vlaneseq
    %v181 = vshrl.u32 %v180, 7
    %v182 = vadd.s32 %v181, 8
    %vm183 = vcmp.gt.s32.totalorder %v49, %v181
    %vm184 = vcmp.gt.s32.totalorder %v49, %v182
    %v185 = vsel %vm183, -1e+30, 0.0
    %v186 = vsel %vm184, -1e+30, 0.0
    %v187 = vpack.c.bf16 %v164, %v159
    %v188 = vpack.c.bf16 %v174, %v169
    %v189 = vld [vmem:[#allocation2] sm:$0xf]
    %v190 = vld [vmem:[#allocation2 + $0x4] sm:$0xf]
    %v191 = vld [vmem:[#allocation2 + $0x8] sm:$0xf]
    %v192 = vld [vmem:[#allocation2 + $0xc] sm:$0xf]
    %v193 = vld [vmem:[#allocation2 + $0x10] sm:$0xf]
    %v194 = vld [vmem:[#allocation2 + $0x14] sm:$0xf]
    %v195 = vld [vmem:[#allocation2 + $0x18] sm:$0xf]
    %v196 = vld [vmem:[#allocation2 + $0x1c] sm:$0xf]
    %v197 = vld [vmem:[#allocation2 + $0x20] sm:$0xf]
    %v198 = vld [vmem:[#allocation2 + $0x24] sm:$0xf]
    %v199 = vld [vmem:[#allocation2 + $0x28] sm:$0xf]
    %v200 = vld [vmem:[#allocation2 + $0x2c] sm:$0xf]
    %v201 = vld [vmem:[#allocation2 + $0x30] sm:$0xf]
    %v202 = vld [vmem:[#allocation2 + $0x34] sm:$0xf]
    %v203 = vld [vmem:[#allocation2 + $0x38] sm:$0xf]
    %v204 = vld [vmem:[#allocation2 + $0x3c] sm:$0xf]
    %v205 = vld [vmem:[#allocation5 + $0x28] sm:$0x1]
    %v206 = vlaneseq
    %v207 = vshrl.u32 %v206, 7
    %v208 = vsub.s32 0, %v207
    %v209 = vrot.slane %v205, %v208
    %v226 = vunpack.c.l.b16 %v189
    %v227 = vunpack.c.l.b16 %v190
    %v228 = vunpack.c.l.b16 %v191
    %v229 = vunpack.c.l.b16 %v192
    %v230 = vunpack.c.l.b16 %v193
    %v231 = vunpack.c.l.b16 %v194
    %v232 = vunpack.c.l.b16 %v195
    %v233 = vunpack.c.l.b16 %v196
    %v234 = vunpack.c.l.b16 %v197
    %v235 = vunpack.c.l.b16 %v198
    %v236 = vunpack.c.l.b16 %v199
    %v237 = vunpack.c.l.b16 %v200
    %v238 = vunpack.c.l.b16 %v201
    %v239 = vunpack.c.l.b16 %v202
    %v240 = vunpack.c.l.b16 %v203
    %v241 = vunpack.c.l.b16 %v204
    %v242 = vpack.c.b16 %v227, %v226
    %v243 = vpack.c.b16 %v229, %v228
    %v244 = vpack.c.b16 %v231, %v230
    %v245 = vpack.c.b16 %v233, %v232
    %v246 = vpack.c.b16 %v235, %v234
    %v247 = vpack.c.b16 %v237, %v236
    %v248 = vpack.c.b16 %v239, %v238
    %v249 = vpack.c.b16 %v241, %v240
    %258 = vmatprep.subr.bf16.mxu0 0
    %259 = vmatpush1.bf16.msra.mxu0 %v242
    %260 = vmatprep.subr.bf16.mxu0 0
    %261 = vmatpush1.bf16.msra.mxu0 %v243
    %262 = vmatprep.subr.bf16.mxu0 0
    %263 = vmatpush1.bf16.msra.mxu0 %v244
    %264 = vmatprep.subr.bf16.mxu0 0
    %265 = vmatpush1.bf16.msra.mxu0 %v245
    %266 = vmatprep.subr.bf16.mxu0 0
    %267 = vmatpush1.bf16.msra.mxu0 %v246
    %268 = vmatprep.subr.bf16.mxu0 0
    %269 = vmatpush1.bf16.msra.mxu0 %v247
    %270 = vmatprep.subr.bf16.mxu0 0
    %271 = vmatpush1.bf16.msra.mxu0 %v248
    %272 = vmatprep.subr.bf16.mxu0 0
    %273 = vmatpush1.bf16.msra.mxu0 %v249
    %274 = vmatprep.subr.bf16.mxu0 0
    %275 = vmatpush1.bf16.msra.mxu0 0
    %276 = vmatprep.subr.bf16.mxu0 0
    %277 = vmatpush1.bf16.msra.mxu0 0
    %278 = vmatprep.subr.bf16.mxu0 0
    %279 = vmatpush1.bf16.msra.mxu0 0
    %280 = vmatprep.subr.bf16.mxu0 0
    %281 = vmatpush1.bf16.msra.mxu0 0
    %282 = vmatprep.subr.bf16.mxu0 0
    %283 = vmatpush1.bf16.msra.mxu0 0
    %284 = vmatprep.subr.bf16.mxu0 0
    %285 = vmatpush1.bf16.msra.mxu0 0
    %286 = vmatprep.subr.bf16.mxu0 0
    %287 = vmatpush1.bf16.msra.mxu0 0
    %288 = vmatprep.subr.bf16.mxu0 0
    %289 = vmatpush1.bf16.msra.mxu0 0
    %290 = vmatprep.mubr.bf16.mxu0 0
    %291 = vmatmul.mubr.bf16.gmra.mrb[0].mxu0 %v187
    %v292 = vpop.f32.mrb[0].mxu0
    %v293 = vadd.f32 %v209, %v292
    %v294 = vpop.f32.mrb[0].mxu0
    %v295 = vpop.f32.mrb[0].mxu0
    %v296 = vadd.f32 %v209, %v295
    %v297 = vpop.f32.mrb[0].mxu0
    %298 = vmatprep.mubr.bf16.mxu0 0
    %299 = vmatmul.mubr.bf16.gmra.mrb[0].mxu0 %v188
    %v300 = vpop.f32.mrb[0].mxu0
    %v301 = vadd.f32 %v209, %v300
    %v302 = vpop.f32.mrb[0].mxu0
    %v303 = vpop.f32.mrb[0].mxu0
    %v304 = vadd.f32 %v209, %v303
    %v305 = vpop.f32.mrb[0].mxu0
    %306 = vdwg.mxu0
    %v307 = vld [vmem:[#allocation2 + $0x40] sm:$0xf]
    %v308 = vld [vmem:[#allocation2 + $0x44] sm:$0xf]
    %v309 = vld [vmem:[#allocation2 + $0x48] sm:$0xf]
    %v310 = vld [vmem:[#allocation2 + $0x4c] sm:$0xf]
    %v311 = vld [vmem:[#allocation2 + $0x50] sm:$0xf]
    %v312 = vld [vmem:[#allocation2 + $0x54] sm:$0xf]
    %v313 = vld [vmem:[#allocation2 + $0x58] sm:$0xf]
    %v314 = vld [vmem:[#allocation2 + $0x5c] sm:$0xf]
    %v315 = vld [vmem:[#allocation2 + $0x60] sm:$0xf]
    %v316 = vld [vmem:[#allocation2 + $0x64] sm:$0xf]
    %v317 = vld [vmem:[#allocation2 + $0x68] sm:$0xf]
    %v318 = vld [vmem:[#allocation2 + $0x6c] sm:$0xf]
    %v319 = vld [vmem:[#allocation2 + $0x70] sm:$0xf]
    %v320 = vld [vmem:[#allocation2 + $0x74] sm:$0xf]
    %v321 = vld [vmem:[#allocation2 + $0x78] sm:$0xf]
    %v322 = vld [vmem:[#allocation2 + $0x7c] sm:$0xf]
    %v323 = vld [vmem:[#allocation5 + $0x29] sm:$0x1]
    %v324 = vlaneseq
    %v325 = vshrl.u32 %v324, 7
    %v326 = vsub.s32 0, %v325
    %v327 = vrot.slane %v323, %v326
    %v344 = vunpack.c.l.b16 %v307
    %v345 = vunpack.c.l.b16 %v308
    %v346 = vunpack.c.l.b16 %v309
    %v347 = vunpack.c.l.b16 %v310
    %v348 = vunpack.c.l.b16 %v311
    %v349 = vunpack.c.l.b16 %v312
    %v350 = vunpack.c.l.b16 %v313
    %v351 = vunpack.c.l.b16 %v314
    %v352 = vunpack.c.l.b16 %v315
    %v353 = vunpack.c.l.b16 %v316
    %v354 = vunpack.c.l.b16 %v317
    %v355 = vunpack.c.l.b16 %v318
    %v356 = vunpack.c.l.b16 %v319
    %v357 = vunpack.c.l.b16 %v320
    %v358 = vunpack.c.l.b16 %v321
    %v359 = vunpack.c.l.b16 %v322
    %v360 = vpack.c.b16 %v345, %v344
    %v361 = vpack.c.b16 %v347, %v346
    %v362 = vpack.c.b16 %v349, %v348
    %v363 = vpack.c.b16 %v351, %v350
    %v364 = vpack.c.b16 %v353, %v352
    %v365 = vpack.c.b16 %v355, %v354
    %v366 = vpack.c.b16 %v357, %v356
    %v367 = vpack.c.b16 %v359, %v358
    %376 = vmatprep.subr.bf16.mxu0 0
    %377 = vmatpush1.bf16.msra.mxu0 %v360
    %378 = vmatprep.subr.bf16.mxu0 0
    %379 = vmatpush1.bf16.msra.mxu0 %v361
    %380 = vmatprep.subr.bf16.mxu0 0
    %381 = vmatpush1.bf16.msra.mxu0 %v362
    %382 = vmatprep.subr.bf16.mxu0 0
    %383 = vmatpush1.bf16.msra.mxu0 %v363
    %384 = vmatprep.subr.bf16.mxu0 0
    %385 = vmatpush1.bf16.msra.mxu0 %v364
    %386 = vmatprep.subr.bf16.mxu0 0
    %387 = vmatpush1.bf16.msra.mxu0 %v365
    %388 = vmatprep.subr.bf16.mxu0 0
    %389 = vmatpush1.bf16.msra.mxu0 %v366
    %390 = vmatprep.subr.bf16.mxu0 0
    %391 = vmatpush1.bf16.msra.mxu0 %v367
    %392 = vmatprep.subr.bf16.mxu0 0
    %393 = vmatpush1.bf16.msra.mxu0 0
    %394 = vmatprep.subr.bf16.mxu0 0
    %395 = vmatpush1.bf16.msra.mxu0 0
    %396 = vmatprep.subr.bf16.mxu0 0
    %397 = vmatpush1.bf16.msra.mxu0 0
    %398 = vmatprep.subr.bf16.mxu0 0
    %399 = vmatpush1.bf16.msra.mxu0 0
    %400 = vmatprep.subr.bf16.mxu0 0
    %401 = vmatpush1.bf16.msra.mxu0 0
    %402 = vmatprep.subr.bf16.mxu0 0
    %403 = vmatpush1.bf16.msra.mxu0 0
    %404 = vmatprep.subr.bf16.mxu0 0
    %405 = vmatpush1.bf16.msra.mxu0 0
    %406 = vmatprep.subr.bf16.mxu0 0
    %407 = vmatpush1.bf16.msra.mxu0 0
    %408 = vmatprep.mubr.bf16.mxu0 0
    %409 = vmatmul.mubr.bf16.gmra.mrb[0].mxu0 %v187
    %v410 = vpop.f32.mrb[0].mxu0
    %v411 = vadd.f32 %v327, %v410
    %v412 = vpop.f32.mrb[0].mxu0
    %v413 = vpop.f32.mrb[0].mxu0
    %v414 = vadd.f32 %v327, %v413
    %v415 = vpop.f32.mrb[0].mxu0
    %416 = vmatprep.mubr.bf16.mxu0 0
    %417 = vmatmul.mubr.bf16.gmra.mrb[0].mxu0 %v188
    %v418 = vpop.f32.mrb[0].mxu0
    %v419 = vadd.f32 %v327, %v418
    %v420 = vpop.f32.mrb[0].mxu0
    %v421 = vpop.f32.mrb[0].mxu0
    %v422 = vadd.f32 %v327, %v421
    %v423 = vpop.f32.mrb[0].mxu0
    %424 = vdwg.mxu0
    %v425 = vld [vmem:[#allocation2 + $0x80] sm:$0xf]
    %v426 = vld [vmem:[#allocation2 + $0x84] sm:$0xf]
    %v427 = vld [vmem:[#allocation2 + $0x88] sm:$0xf]
    %v428 = vld [vmem:[#allocation2 + $0x8c] sm:$0xf]
    %v429 = vld [vmem:[#allocation2 + $0x90] sm:$0xf]
    %v430 = vld [vmem:[#allocation2 + $0x94] sm:$0xf]
    %v431 = vld [vmem:[#allocation2 + $0x98] sm:$0xf]
    %v432 = vld [vmem:[#allocation2 + $0x9c] sm:$0xf]
    %v433 = vld [vmem:[#allocation2 + $0xa0] sm:$0xf]
    %v434 = vld [vmem:[#allocation2 + $0xa4] sm:$0xf]
    %v435 = vld [vmem:[#allocation2 + $0xa8] sm:$0xf]
    %v436 = vld [vmem:[#allocation2 + $0xac] sm:$0xf]
    %v437 = vld [vmem:[#allocation2 + $0xb0] sm:$0xf]
    %v438 = vld [vmem:[#allocation2 + $0xb4] sm:$0xf]
    %v439 = vld [vmem:[#allocation2 + $0xb8] sm:$0xf]
    %v440 = vld [vmem:[#allocation2 + $0xbc] sm:$0xf]
    %v441 = vld [vmem:[#allocation5 + $0x2a] sm:$0x1]
    %v442 = vlaneseq
    %v443 = vshrl.u32 %v442, 7
    %v444 = vsub.s32 0, %v443
    %v445 = vrot.slane %v441, %v444
    %v462 = vunpack.c.l.b16 %v425
    %v463 = vunpack.c.l.b16 %v426
    %v464 = vunpack.c.l.b16 %v427
    %v465 = vunpack.c.l.b16 %v428
    %v466 = vunpack.c.l.b16 %v429
    %v467 = vunpack.c.l.b16 %v430
    %v468 = vunpack.c.l.b16 %v431
    %v469 = vunpack.c.l.b16 %v432
    %v470 = vunpack.c.l.b16 %v433
    %v471 = vunpack.c.l.b16 %v434
    %v472 = vunpack.c.l.b16 %v435
    %v473 = vunpack.c.l.b16 %v436
    %v474 = vunpack.c.l.b16 %v437
    %v475 = vunpack.c.l.b16 %v438
    %v476 = vunpack.c.l.b16 %v439
    %v477 = vunpack.c.l.b16 %v440
    %v478 = vpack.c.b16 %v463, %v462
    %v479 = vpack.c.b16 %v465, %v464
    %v480 = vpack.c.b16 %v467, %v466
    %v481 = vpack.c.b16 %v469, %v468
    %v482 = vpack.c.b16 %v471, %v470
    %v483 = vpack.c.b16 %v473, %v472
    %v484 = vpack.c.b16 %v475, %v474
    %v485 = vpack.c.b16 %v477, %v476
    %494 = vmatprep.subr.bf16.mxu0 0
    %495 = vmatpush1.bf16.msra.mxu0 %v478
    %496 = vmatprep.subr.bf16.mxu0 0
    %497 = vmatpush1.bf16.msra.mxu0 %v479
    %498 = vmatprep.subr.bf16.mxu0 0
    %499 = vmatpush1.bf16.msra.mxu0 %v480
    %500 = vmatprep.subr.bf16.mxu0 0
    %501 = vmatpush1.bf16.msra.mxu0 %v481
    %502 = vmatprep.subr.bf16.mxu0 0
    %503 = vmatpush1.bf16.msra.mxu0 %v482
    %504 = vmatprep.subr.bf16.mxu0 0
    %505 = vmatpush1.bf16.msra.mxu0 %v483
    %506 = vmatprep.subr.bf16.mxu0 0
    %507 = vmatpush1.bf16.msra.mxu0 %v484
    %508 = vmatprep.subr.bf16.mxu0 0
    %509 = vmatpush1.bf16.msra.mxu0 %v485
    %510 = vmatprep.subr.bf16.mxu0 0
    %511 = vmatpush1.bf16.msra.mxu0 0
    %512 = vmatprep.subr.bf16.mxu0 0
    %513 = vmatpush1.bf16.msra.mxu0 0
    %514 = vmatprep.subr.bf16.mxu0 0
    %515 = vmatpush1.bf16.msra.mxu0 0
    %516 = vmatprep.subr.bf16.mxu0 0
    %517 = vmatpush1.bf16.msra.mxu0 0
    %518 = vmatprep.subr.bf16.mxu0 0
    %519 = vmatpush1.bf16.msra.mxu0 0
    %520 = vmatprep.subr.bf16.mxu0 0
    %521 = vmatpush1.bf16.msra.mxu0 0
    %522 = vmatprep.subr.bf16.mxu0 0
    %523 = vmatpush1.bf16.msra.mxu0 0
    %524 = vmatprep.subr.bf16.mxu0 0
    %525 = vmatpush1.bf16.msra.mxu0 0
    %526 = vmatprep.mubr.bf16.mxu0 0
    %527 = vmatmul.mubr.bf16.gmra.mrb[0].mxu0 %v187
    %v528 = vpop.f32.mrb[0].mxu0
    %v529 = vadd.f32 %v445, %v528
    %v530 = vpop.f32.mrb[0].mxu0
    %v531 = vpop.f32.mrb[0].mxu0
    %v532 = vadd.f32 %v445, %v531
    %v533 = vpop.f32.mrb[0].mxu0
    %534 = vmatprep.mubr.bf16.mxu0 0
    %535 = vmatmul.mubr.bf16.gmra.mrb[0].mxu0 %v188
    %v536 = vpop.f32.mrb[0].mxu0
    %v537 = vadd.f32 %v445, %v536
    %v538 = vpop.f32.mrb[0].mxu0
    %v539 = vpop.f32.mrb[0].mxu0
    %v540 = vadd.f32 %v445, %v539
    %v541 = vpop.f32.mrb[0].mxu0
    %542 = vdwg.mxu0
    %v543 = vpack.c.bf16 %v296, %v293
    %v544 = vpack.c.bf16 %v304, %v301
    %v545 = vpack.c.bf16 %v414, %v411
    %v546 = vpack.c.bf16 %v422, %v419
    %v547 = vpack.c.bf16 %v532, %v529
    %v548 = vpack.c.bf16 %v540, %v537
    %549 = vmatprep.subr.bf16.mxu0 0
    %550 = vmatpush1.bf16.xpose.msra.mxu0 %v545
    %551 = vmatprep.subr.bf16.mxu0 0
    %552 = vmatpush1.bf16.xpose.msra.mxu0 0
    %553 = vmatprep.subr.bf16.mxu0 0
    %554 = vmatpush1.bf16.xpose.msra.mxu0 0
    %555 = vmatprep.subr.bf16.mxu0 0
    %556 = vmatpush1.bf16.xpose.msra.mxu0 0
    %557 = vmatprep.subr.bf16.mxu0 0
    %558 = vmatpush1.bf16.xpose.msra.mxu0 0
    %559 = vmatprep.subr.bf16.mxu0 0
    %560 = vmatpush1.bf16.xpose.msra.mxu0 0
    %561 = vmatprep.subr.bf16.mxu0 0
    %562 = vmatpush1.bf16.xpose.msra.mxu0 0
    %563 = vmatprep.subr.bf16.mxu0 0
    %564 = vmatpush1.bf16.xpose.msra.mxu0 0
    %565 = vmatprep.subr.bf16.mxu0 0
    %566 = vmatpush1.bf16.xpose.msra.mxu0 0
    %567 = vmatprep.subr.bf16.mxu0 0
    %568 = vmatpush1.bf16.xpose.msra.mxu0 0
    %569 = vmatprep.subr.bf16.mxu0 0
    %570 = vmatpush1.bf16.xpose.msra.mxu0 0
    %571 = vmatprep.subr.bf16.mxu0 0
    %572 = vmatpush1.bf16.xpose.msra.mxu0 0
    %573 = vmatprep.subr.bf16.mxu0 0
    %574 = vmatpush1.bf16.xpose.msra.mxu0 0
    %575 = vmatprep.subr.bf16.mxu0 0
    %576 = vmatpush1.bf16.xpose.msra.mxu0 0
    %577 = vmatprep.subr.bf16.mxu0 0
    %578 = vmatpush1.bf16.xpose.msra.mxu0 0
    %579 = vmatprep.subr.bf16.mxu0 0
    %580 = vmatpush1.bf16.xpose.msra.mxu0 0
    %581 = vmatprep.mubr.bf16.mxu0 0
    %582 = vmatmul.mubr.bf16.gmra.mrb[0].mxu0 %v543
    %v583 = vpop.f32.mrb[0].mxu0
    %v584 = vadd.f32 %v185, %v583
    %v585 = vpop.f32.mrb[0].mxu0
    %v586 = vpop.f32.mrb[0].mxu0
    %v587 = vadd.f32 %v186, %v586
    %v588 = vpop.f32.mrb[0].mxu0
    %589 = vdwg.mxu0
    %590 = vmatprep.subr.bf16.mxu0 0
    %591 = vmatpush1.bf16.xpose.msra.mxu0 %v546
    %592 = vmatprep.subr.bf16.mxu0 0
    %593 = vmatpush1.bf16.xpose.msra.mxu0 0
    %594 = vmatprep.subr.bf16.mxu0 0
    %595 = vmatpush1.bf16.xpose.msra.mxu0 0
    %596 = vmatprep.subr.bf16.mxu0 0
    %597 = vmatpush1.bf16.xpose.msra.mxu0 0
    %598 = vmatprep.subr.bf16.mxu0 0
    %599 = vmatpush1.bf16.xpose.msra.mxu0 0
    %600 = vmatprep.subr.bf16.mxu0 0
    %601 = vmatpush1.bf16.xpose.msra.mxu0 0
    %602 = vmatprep.subr.bf16.mxu0 0
    %603 = vmatpush1.bf16.xpose.msra.mxu0 0
    %604 = vmatprep.subr.bf16.mxu0 0
    %605 = vmatpush1.bf16.xpose.msra.mxu0 0
    %606 = vmatprep.subr.bf16.mxu0 0
    %607 = vmatpush1.bf16.xpose.msra.mxu0 0
    %608 = vmatprep.subr.bf16.mxu0 0
    %609 = vmatpush1.bf16.xpose.msra.mxu0 0
    %610 = vmatprep.subr.bf16.mxu0 0
    %611 = vmatpush1.bf16.xpose.msra.mxu0 0
    %612 = vmatprep.subr.bf16.mxu0 0
    %613 = vmatpush1.bf16.xpose.msra.mxu0 0
    %614 = vmatprep.subr.bf16.mxu0 0
    %615 = vmatpush1.bf16.xpose.msra.mxu0 0
    %616 = vmatprep.subr.bf16.mxu0 0
    %617 = vmatpush1.bf16.xpose.msra.mxu0 0
    %618 = vmatprep.subr.bf16.mxu0 0
    %619 = vmatpush1.bf16.xpose.msra.mxu0 0
    %620 = vmatprep.subr.bf16.mxu0 0
    %621 = vmatpush1.bf16.xpose.msra.mxu0 0
    %622 = vmatprep.mubr.bf16.mxu0 0
    %623 = vmatmul.mubr.bf16.gmra.mrb[0].mxu0 %v544
    %v624 = vpop.f32.mrb[0].mxu0
    %v625 = vadd.f32 %v185, %v624
    %v626 = vpop.f32.mrb[0].mxu0
    %v627 = vpop.f32.mrb[0].mxu0
    %v628 = vadd.f32 %v186, %v627
    %v629 = vpop.f32.mrb[0].mxu0
    %630 = vdwg.mxu0
    %vm631 = vcmask 130048
    %v632 = vsel %vm631, %v584, -inf
    %633 = vmax.xlane.f32.xlu0 %v632
    %v634 = vpop.xlane.xlu0 %633
    %v635 = vsel %vm631, %v587, -inf
    %636 = vmax.xlane.f32.xlu0 %v635
    %v637 = vpop.xlane.xlu0 %636
    %v638 = vsel %vm631, %v625, -inf
    %639 = vmax.xlane.f32.xlu0 %v638
    %v640 = vpop.xlane.xlu0 %639
    %v641 = vsel %vm631, %v628, -inf
    %642 = vmax.xlane.f32.xlu0 %v641
    %v643 = vpop.xlane.xlu0 %642
    %v644 = vsub.f32 %v584, %v634
    %v645 = vsub.f32 %v587, %v637
    %v646 = vsub.f32 %v625, %v640
    %v647 = vsub.f32 %v628, %v643
    %v648 = vmul.f32 %v644, 1.442695
    %v649 = vpow.pop %v648
    %v650 = vmul.f32 %v645, 1.442695
    %v651 = vpow.pop %v650
    %v652 = vmul.f32 %v646, 1.442695
    %v653 = vpow.pop %v652
    %v654 = vmul.f32 %v647, 1.442695
    %v655 = vpow.pop %v654
    %v656 = vsel %vm631, %v649, 0.0
    %657 = vadd.xlane.f32.xlu0 %v656
    %v658 = vpop.xlane.xlu0 %657
    %v659 = vsel %vm631, %v651, 0.0
    %660 = vadd.xlane.f32.xlu0 %v659
    %v661 = vpop.xlane.xlu0 %660
    %v662 = vsel %vm631, %v653, 0.0
    %663 = vadd.xlane.f32.xlu0 %v662
    %v664 = vpop.xlane.xlu0 %663
    %v665 = vsel %vm631, %v655, 0.0
    %666 = vadd.xlane.f32.xlu0 %v665
    %v667 = vpop.xlane.xlu0 %666
    %v668 = vrcp.pop %v658
    %v669 = vmul.f32 %v649, %v668
    %v670 = vrcp.pop %v661
    %v671 = vmul.f32 %v651, %v670
    %v672 = vrcp.pop %v664
    %v673 = vmul.f32 %v653, %v672
    %v674 = vrcp.pop %v667
    %v675 = vmul.f32 %v655, %v674
    %v676 = vpack.c.bf16 %v671, %v669
    %v677 = vpack.c.bf16 %v675, %v673
    %v679 = vsel %vm631, %v676, 0
    %681 = vmatprep.subr.bf16.mxu0 0
    %682 = vmatpush1.bf16.msra.mxu0 %v547
    %683 = vmatprep.subr.bf16.mxu0 0
    %684 = vmatpush1.bf16.msra.mxu0 0
    %685 = vmatprep.subr.bf16.mxu0 0
    %686 = vmatpush1.bf16.msra.mxu0 0
    %687 = vmatprep.subr.bf16.mxu0 0
    %688 = vmatpush1.bf16.msra.mxu0 0
    %689 = vmatprep.subr.bf16.mxu0 0
    %690 = vmatpush1.bf16.msra.mxu0 0
    %691 = vmatprep.subr.bf16.mxu0 0
    %692 = vmatpush1.bf16.msra.mxu0 0
    %693 = vmatprep.subr.bf16.mxu0 0
    %694 = vmatpush1.bf16.msra.mxu0 0
    %695 = vmatprep.subr.bf16.mxu0 0
    %696 = vmatpush1.bf16.msra.mxu0 0
    %697 = vmatprep.subr.bf16.mxu0 0
    %698 = vmatpush1.bf16.msra.mxu0 0
    %699 = vmatprep.subr.bf16.mxu0 0
    %700 = vmatpush1.bf16.msra.mxu0 0
    %701 = vmatprep.subr.bf16.mxu0 0
    %702 = vmatpush1.bf16.msra.mxu0 0
    %703 = vmatprep.subr.bf16.mxu0 0
    %704 = vmatpush1.bf16.msra.mxu0 0
    %705 = vmatprep.subr.bf16.mxu0 0
    %706 = vmatpush1.bf16.msra.mxu0 0
    %707 = vmatprep.subr.bf16.mxu0 0
    %708 = vmatpush1.bf16.msra.mxu0 0
    %709 = vmatprep.subr.bf16.mxu0 0
    %710 = vmatpush1.bf16.msra.mxu0 0
    %711 = vmatprep.subr.bf16.mxu0 0
    %712 = vmatpush1.bf16.msra.mxu0 0
    %713 = vmatprep.mubr.bf16.mxu0 0
    %714 = vmatmul.mubr.bf16.gmra.mrb[0].mxu0 %v679
    %v715 = vpop.f32.mrb[0].mxu0
    %v716 = vadd.f32 0.0, %v715
    %v717 = vpop.f32.mrb[0].mxu0
    %v718 = vpop.f32.mrb[0].mxu0
    %v719 = vadd.f32 0.0, %v718
    %v720 = vpop.f32.mrb[0].mxu0
    %721 = vdwg.mxu0
    %v723 = vsel %vm631, %v677, 0
    %725 = vmatprep.subr.bf16.mxu0 0
    %726 = vmatpush1.bf16.msra.mxu0 %v548
    %727 = vmatprep.subr.bf16.mxu0 0
    %728 = vmatpush1.bf16.msra.mxu0 0
    %729 = vmatprep.subr.bf16.mxu0 0
    %730 = vmatpush1.bf16.msra.mxu0 0
    %731 = vmatprep.subr.bf16.mxu0 0
    %732 = vmatpush1.bf16.msra.mxu0 0
    %733 = vmatprep.subr.bf16.mxu0 0
    %734 = vmatpush1.bf16.msra.mxu0 0
    %735 = vmatprep.subr.bf16.mxu0 0
    %736 = vmatpush1.bf16.msra.mxu0 0
    %737 = vmatprep.subr.bf16.mxu0 0
    %738 = vmatpush1.bf16.msra.mxu0 0
    %739 = vmatprep.subr.bf16.mxu0 0
    %740 = vmatpush1.bf16.msra.mxu0 0
    %741 = vmatprep.subr.bf16.mxu0 0
    %742 = vmatpush1.bf16.msra.mxu0 0
    %743 = vmatprep.subr.bf16.mxu0 0
    %744 = vmatpush1.bf16.msra.mxu0 0
    %745 = vmatprep.subr.bf16.mxu0 0
    %746 = vmatpush1.bf16.msra.mxu0 0
    %747 = vmatprep.subr.bf16.mxu0 0
    %748 = vmatpush1.bf16.msra.mxu0 0
    %749 = vmatprep.subr.bf16.mxu0 0
    %750 = vmatpush1.bf16.msra.mxu0 0
    %751 = vmatprep.subr.bf16.mxu0 0
    %752 = vmatpush1.bf16.msra.mxu0 0
    %753 = vmatprep.subr.bf16.mxu0 0
    %754 = vmatpush1.bf16.msra.mxu0 0
    %755 = vmatprep.subr.bf16.mxu0 0
    %756 = vmatpush1.bf16.msra.mxu0 0
    %757 = vmatprep.mubr.bf16.mxu0 0
    %758 = vmatmul.mubr.bf16.gmra.mrb[0].mxu0 %v723
    %v759 = vpop.f32.mrb[0].mxu0
    %v760 = vadd.f32 0.0, %v759
    %v761 = vpop.f32.mrb[0].mxu0
    %v762 = vpop.f32.mrb[0].mxu0
    %v763 = vadd.f32 0.0, %v762
    %v764 = vpop.f32.mrb[0].mxu0
    %765 = vdwg.mxu0
    %v766 = vpack.c.bf16 %v719, %v716
    %v767 = vpack.c.bf16 %v763, %v760
    %v768 = vld [vmem:[#allocation2 + $0xc0] sm:$0xf]
    %v769 = vld [vmem:[#allocation2 + $0xc4] sm:$0xf]
    %v770 = vld [vmem:[#allocation2 + $0xc8] sm:$0xf]
    %v771 = vld [vmem:[#allocation2 + $0xcc] sm:$0xf]
    %v772 = vld [vmem:[#allocation2 + $0xd0] sm:$0xf]
    %v773 = vld [vmem:[#allocation2 + $0xd4] sm:$0xf]
    %v774 = vld [vmem:[#allocation2 + $0xd8] sm:$0xf]
    %v775 = vld [vmem:[#allocation2 + $0xdc] sm:$0xf]
    %v776 = vld [vmem:[#allocation2 + $0xe0] sm:$0xf]
    %v777 = vld [vmem:[#allocation2 + $0xe4] sm:$0xf]
    %v778 = vld [vmem:[#allocation2 + $0xe8] sm:$0xf]
    %v779 = vld [vmem:[#allocation2 + $0xec] sm:$0xf]
    %v780 = vld [vmem:[#allocation2 + $0xf0] sm:$0xf]
    %v781 = vld [vmem:[#allocation2 + $0xf4] sm:$0xf]
    %v782 = vld [vmem:[#allocation2 + $0xf8] sm:$0xf]
    %v783 = vld [vmem:[#allocation2 + $0xfc] sm:$0xf]
    %v784 = vld [vmem:[#allocation5 + $0x2b] sm:$0x1]
    %v785 = vlaneseq
    %v786 = vshrl.u32 %v785, 7
    %v787 = vsub.s32 0, %v786
    %v788 = vrot.slane %v784, %v787
    %v805 = vunpack.c.l.b16 %v768
    %v806 = vunpack.c.l.b16 %v769
    %v807 = vunpack.c.l.b16 %v770
    %v808 = vunpack.c.l.b16 %v771
    %v809 = vunpack.c.l.b16 %v772
    %v810 = vunpack.c.l.b16 %v773
    %v811 = vunpack.c.l.b16 %v774
    %v812 = vunpack.c.l.b16 %v775
    %v813 = vunpack.c.l.b16 %v776
    %v814 = vunpack.c.l.b16 %v777
    %v815 = vunpack.c.l.b16 %v778
    %v816 = vunpack.c.l.b16 %v779
    %v817 = vunpack.c.l.b16 %v780
    %v818 = vunpack.c.l.b16 %v781
    %v819 = vunpack.c.l.b16 %v782
    %v820 = vunpack.c.l.b16 %v783
    %v821 = vpack.c.b16 %v806, %v805
    %v822 = vpack.c.b16 %v808, %v807
    %v823 = vpack.c.b16 %v810, %v809
    %v824 = vpack.c.b16 %v812, %v811
    %v825 = vpack.c.b16 %v814, %v813
    %v826 = vpack.c.b16 %v816, %v815
    %v827 = vpack.c.b16 %v818, %v817
    %v828 = vpack.c.b16 %v820, %v819
    %837 = vmatprep.subr.bf16.mxu0 0
    %838 = vmatpush1.bf16.msra.mxu0 %v821
    %839 = vmatprep.subr.bf16.mxu0 0
    %840 = vmatpush1.bf16.msra.mxu0 %v822
    %841 = vmatprep.subr.bf16.mxu0 0
    %842 = vmatpush1.bf16.msra.mxu0 %v823
    %843 = vmatprep.subr.bf16.mxu0 0
    %844 = vmatpush1.bf16.msra.mxu0 %v824
    %845 = vmatprep.subr.bf16.mxu0 0
    %846 = vmatpush1.bf16.msra.mxu0 %v825
    %847 = vmatprep.subr.bf16.mxu0 0
    %848 = vmatpush1.bf16.msra.mxu0 %v826
    %849 = vmatprep.subr.bf16.mxu0 0
    %850 = vmatpush1.bf16.msra.mxu0 %v827
    %851 = vmatprep.subr.bf16.mxu0 0
    %852 = vmatpush1.bf16.msra.mxu0 %v828
    %853 = vmatprep.subr.bf16.mxu0 0
    %854 = vmatpush1.bf16.msra.mxu0 0
    %855 = vmatprep.subr.bf16.mxu0 0
    %856 = vmatpush1.bf16.msra.mxu0 0
    %857 = vmatprep.subr.bf16.mxu0 0
    %858 = vmatpush1.bf16.msra.mxu0 0
    %859 = vmatprep.subr.bf16.mxu0 0
    %860 = vmatpush1.bf16.msra.mxu0 0
    %861 = vmatprep.subr.bf16.mxu0 0
    %862 = vmatpush1.bf16.msra.mxu0 0
    %863 = vmatprep.subr.bf16.mxu0 0
    %864 = vmatpush1.bf16.msra.mxu0 0
    %865 = vmatprep.subr.bf16.mxu0 0
    %866 = vmatpush1.bf16.msra.mxu0 0
    %867 = vmatprep.subr.bf16.mxu0 0
    %868 = vmatpush1.bf16.msra.mxu0 0
    %869 = vmatprep.mubr.bf16.mxu0 0
    %870 = vmatmul.mubr.bf16.gmra.mrb[0].mxu0 %v766
    %v871 = vpop.f32.mrb[0].mxu0
    %v872 = vadd.f32 %v788, %v871
    %v873 = vpop.f32.mrb[0].mxu0
    %v874 = vpop.f32.mrb[0].mxu0
    %v875 = vadd.f32 %v788, %v874
    %v876 = vpop.f32.mrb[0].mxu0
    %877 = vmatprep.mubr.bf16.mxu0 0
    %878 = vmatmul.mubr.bf16.gmra.mrb[0].mxu0 %v767
    %v879 = vpop.f32.mrb[0].mxu0
    %v880 = vadd.f32 %v788, %v879
    %v881 = vpop.f32.mrb[0].mxu0
    %v882 = vpop.f32.mrb[0].mxu0
    %v883 = vadd.f32 %v788, %v882
    %v884 = vpop.f32.mrb[0].mxu0
    %885 = vdwg.mxu0
    %v886 = vld [vmem:[#allocation5 + $0x2c] sm:$0x1]
    %v887 = vld [vmem:[#allocation5 + $0x2d] sm:$0x1]
    %v888 = vadd.f32 %v159, %v872
    %v889 = vadd.f32 %v164, %v875
    %v890 = vadd.f32 %v169, %v880
    %v891 = vadd.f32 %v174, %v883
    %892 = vadd.xlane.f32.xlu0 %v888
    %v893 = vpop.xlane.xlu0 %892
    %894 = vadd.xlane.f32.xlu0 %v889
    %v895 = vpop.xlane.xlu0 %894
    %896 = vadd.xlane.f32.xlu0 %v890
    %v897 = vpop.xlane.xlu0 %896
    %898 = vadd.xlane.f32.xlu0 %v891
    %v899 = vpop.xlane.xlu0 %898
    %v900 = vmul.f32 %v893, 0.0625
    %v901 = vmul.f32 %v895, 0.0625
    %v902 = vmul.f32 %v897, 0.0625
    %v903 = vmul.f32 %v899, 0.0625
    %v904 = vsub.f32 %v888, %v900
    %v905 = vsub.f32 %v889, %v901
    %v906 = vsub.f32 %v890, %v902
    %v907 = vsub.f32 %v891, %v903
    %v908 = vmul.f32 %v904, %v179
    %v909 = vmul.f32 %v905, %v179
    %v910 = vmul.f32 %v906, %v179
    %v911 = vmul.f32 %v907, %v179
    %v912 = vmul.f32 %v908, %v908
    %v913 = vmul.f32 %v909, %v909
    %v914 = vmul.f32 %v910, %v910
    %v915 = vmul.f32 %v911, %v911
    %916 = vadd.xlane.f32.xlu0 %v912
    %v917 = vpop.xlane.xlu0 %916
    %918 = vadd.xlane.f32.xlu0 %v913
    %v919 = vpop.xlane.xlu0 %918
    %920 = vadd.xlane.f32.xlu0 %v914
    %v921 = vpop.xlane.xlu0 %920
    %922 = vadd.xlane.f32.xlu0 %v915
    %v923 = vpop.xlane.xlu0 %922
    %v924 = vmul.f32 %v917, 0.0625
    %v925 = vmul.f32 %v919, 0.0625
    %v926 = vmul.f32 %v921, 0.0625
    %v927 = vmul.f32 %v923, 0.0625
    %v928 = vadd.f32 %v924, 1e-05
    %v929 = vadd.f32 %v925, 1e-05
    %v930 = vadd.f32 %v926, 1e-05
    %v931 = vadd.f32 %v927, 1e-05
    %v932 = vrsqrt.pop %v928
    %v933 = vrsqrt.pop %v929
    %v934 = vrsqrt.pop %v930
    %v935 = vrsqrt.pop %v931
    %v936 = vmul.f32 %v908, %v932
    %v937 = vmul.f32 %v909, %v933
    %v938 = vmul.f32 %v910, %v934
    %v939 = vmul.f32 %v911, %v935
    %v940 = vlaneseq
    %v941 = vshrl.u32 %v940, 7
    %v942 = vsub.s32 0, %v941
    %v943 = vrot.slane %v886, %v942
    %v944 = vmul.f32 %v936, %v943
    %v945 = vmul.f32 %v937, %v943
    %v946 = vmul.f32 %v938, %v943
    %v947 = vmul.f32 %v939, %v943
    %v948 = vlaneseq
    %v949 = vshrl.u32 %v948, 7
    %v950 = vsub.s32 0, %v949
    %v951 = vrot.slane %v887, %v950
    %v952 = vadd.f32 %v944, %v951
    %v953 = vadd.f32 %v945, %v951
    %v954 = vadd.f32 %v946, %v951
    %v955 = vadd.f32 %v947, %v951
    %v956 = vpack.c.bf16 %v953, %v952
    %v957 = vpack.c.bf16 %v955, %v954
    %v958 = vld [vmem:[#allocation2 + $0x100] sm:$0xf]
    %v959 = vld [vmem:[#allocation2 + $0x104] sm:$0xf]
    %v960 = vld [vmem:[#allocation2 + $0x108] sm:$0xf]
    %v961 = vld [vmem:[#allocation2 + $0x10c] sm:$0xf]
    %v962 = vld [vmem:[#allocation2 + $0x110] sm:$0xf]
    %v963 = vld [vmem:[#allocation2 + $0x114] sm:$0xf]
    %v964 = vld [vmem:[#allocation2 + $0x118] sm:$0xf]
    %v965 = vld [vmem:[#allocation2 + $0x11c] sm:$0xf]
    %v966 = vld [vmem:[#allocation2 + $0x120] sm:$0xf]
    %v967 = vld [vmem:[#allocation2 + $0x124] sm:$0xf]
    %v968 = vld [vmem:[#allocation2 + $0x128] sm:$0xf]
    %v969 = vld [vmem:[#allocation2 + $0x12c] sm:$0xf]
    %v970 = vld [vmem:[#allocation2 + $0x130] sm:$0xf]
    %v971 = vld [vmem:[#allocation2 + $0x134] sm:$0xf]
    %v972 = vld [vmem:[#allocation2 + $0x138] sm:$0xf]
    %v973 = vld [vmem:[#allocation2 + $0x13c] sm:$0xf]
    %v974 = vld [vmem:[#allocation5 + $0x30] sm:$0x1]
    %v975 = vlaneseq
    %v976 = vshrl.u32 %v975, 7
    %v977 = vsub.s32 0, %v976
    %v978 = vrot.slane %v974, %v977
    %v995 = vunpack.c.l.b16 %v958
    %v996 = vunpack.c.l.b16 %v959
    %v997 = vunpack.c.l.b16 %v960
    %v998 = vunpack.c.l.b16 %v961
    %v999 = vunpack.c.l.b16 %v962
    %v1000 = vunpack.c.l.b16 %v963
    %v1001 = vunpack.c.l.b16 %v964
    %v1002 = vunpack.c.l.b16 %v965
    %v1003 = vunpack.c.l.b16 %v966
    %v1004 = vunpack.c.l.b16 %v967
    %v1005 = vunpack.c.l.b16 %v968
    %v1006 = vunpack.c.l.b16 %v969
    %v1007 = vunpack.c.l.b16 %v970
    %v1008 = vunpack.c.l.b16 %v971
    %v1009 = vunpack.c.l.b16 %v972
    %v1010 = vunpack.c.l.b16 %v973
    %v1011 = vpack.c.b16 %v996, %v995
    %v1012 = vpack.c.b16 %v998, %v997
    %v1013 = vpack.c.b16 %v1000, %v999
    %v1014 = vpack.c.b16 %v1002, %v1001
    %v1015 = vpack.c.b16 %v1004, %v1003
    %v1016 = vpack.c.b16 %v1006, %v1005
    %v1017 = vpack.c.b16 %v1008, %v1007
    %v1018 = vpack.c.b16 %v1010, %v1009
    %1027 = vmatprep.subr.bf16.mxu0 0
    %1028 = vmatpush1.bf16.msra.mxu0 %v1011
    %1029 = vmatprep.subr.bf16.mxu0 0
    %1030 = vmatpush1.bf16.msra.mxu0 %v1012
    %1031 = vmatprep.subr.bf16.mxu0 0
    %1032 = vmatpush1.bf16.msra.mxu0 %v1013
    %1033 = vmatprep.subr.bf16.mxu0 0
    %1034 = vmatpush1.bf16.msra.mxu0 %v1014
    %1035 = vmatprep.subr.bf16.mxu0 0
    %1036 = vmatpush1.bf16.msra.mxu0 %v1015
    %1037 = vmatprep.subr.bf16.mxu0 0
    %1038 = vmatpush1.bf16.msra.mxu0 %v1016
    %1039 = vmatprep.subr.bf16.mxu0 0
    %1040 = vmatpush1.bf16.msra.mxu0 %v1017
    %1041 = vmatprep.subr.bf16.mxu0 0
    %1042 = vmatpush1.bf16.msra.mxu0 %v1018
    %1043 = vmatprep.subr.bf16.mxu0 0
    %1044 = vmatpush1.bf16.msra.mxu0 0
    %1045 = vmatprep.subr.bf16.mxu0 0
    %1046 = vmatpush1.bf16.msra.mxu0 0
    %1047 = vmatprep.subr.bf16.mxu0 0
    %1048 = vmatpush1.bf16.msra.mxu0 0
    %1049 = vmatprep.subr.bf16.mxu0 0
    %1050 = vmatpush1.bf16.msra.mxu0 0
    %1051 = vmatprep.subr.bf16.mxu0 0
    %1052 = vmatpush1.bf16.msra.mxu0 0
    %1053 = vmatprep.subr.bf16.mxu0 0
    %1054 = vmatpush1.bf16.msra.mxu0 0
    %1055 = vmatprep.subr.bf16.mxu0 0
    %1056 = vmatpush1.bf16.msra.mxu0 0
    %1057 = vmatprep.subr.bf16.mxu0 0
    %1058 = vmatpush1.bf16.msra.mxu0 0
    %1059 = vmatprep.mubr.bf16.mxu0 0
    %1060 = vmatmul.mubr.bf16.gmra.mrb[0].mxu0 %v956
    %v1061 = vpop.f32.mrb[0].mxu0
    %v1062 = vadd.f32 %v978, %v1061
    %v1063 = vpop.f32.mrb[0].mxu0
    %v1064 = vpop.f32.mrb[0].mxu0
    %v1065 = vadd.f32 %v978, %v1064
    %v1066 = vpop.f32.mrb[0].mxu0
    %1067 = vmatprep.mubr.bf16.mxu0 0
    %1068 = vmatmul.mubr.bf16.gmra.mrb[0].mxu0 %v957
    %v1069 = vpop.f32.mrb[0].mxu0
    %v1070 = vadd.f32 %v978, %v1069
    %v1071 = vpop.f32.mrb[0].mxu0
    %v1072 = vpop.f32.mrb[0].mxu0
    %v1073 = vadd.f32 %v978, %v1072
    %v1074 = vpop.f32.mrb[0].mxu0
    %1075 = vdwg.mxu0
    %v1076 = vld [vmem:[#allocation2 + $0x140] sm:$0xf]
    %v1077 = vld [vmem:[#allocation2 + $0x144] sm:$0xf]
    %v1078 = vld [vmem:[#allocation2 + $0x148] sm:$0xf]
    %v1079 = vld [vmem:[#allocation2 + $0x14c] sm:$0xf]
    %v1080 = vld [vmem:[#allocation2 + $0x150] sm:$0xf]
    %v1081 = vld [vmem:[#allocation2 + $0x154] sm:$0xf]
    %v1082 = vld [vmem:[#allocation2 + $0x158] sm:$0xf]
    %v1083 = vld [vmem:[#allocation2 + $0x15c] sm:$0xf]
    %v1084 = vld [vmem:[#allocation2 + $0x160] sm:$0xf]
    %v1085 = vld [vmem:[#allocation2 + $0x164] sm:$0xf]
    %v1086 = vld [vmem:[#allocation2 + $0x168] sm:$0xf]
    %v1087 = vld [vmem:[#allocation2 + $0x16c] sm:$0xf]
    %v1088 = vld [vmem:[#allocation2 + $0x170] sm:$0xf]
    %v1089 = vld [vmem:[#allocation2 + $0x174] sm:$0xf]
    %v1090 = vld [vmem:[#allocation2 + $0x178] sm:$0xf]
    %v1091 = vld [vmem:[#allocation2 + $0x17c] sm:$0xf]
    %v1092 = vld [vmem:[#allocation5 + $0x31] sm:$0x1]
    %v1093 = vlaneseq
    %v1094 = vshrl.u32 %v1093, 7
    %v1095 = vsub.s32 0, %v1094
    %v1096 = vrot.slane %v1092, %v1095
    %v1113 = vunpack.c.l.b16 %v1076
    %v1114 = vunpack.c.l.b16 %v1077
    %v1115 = vunpack.c.l.b16 %v1078
    %v1116 = vunpack.c.l.b16 %v1079
    %v1117 = vunpack.c.l.b16 %v1080
    %v1118 = vunpack.c.l.b16 %v1081
    %v1119 = vunpack.c.l.b16 %v1082
    %v1120 = vunpack.c.l.b16 %v1083
    %v1121 = vunpack.c.l.b16 %v1084
    %v1122 = vunpack.c.l.b16 %v1085
    %v1123 = vunpack.c.l.b16 %v1086
    %v1124 = vunpack.c.l.b16 %v1087
    %v1125 = vunpack.c.l.b16 %v1088
    %v1126 = vunpack.c.l.b16 %v1089
    %v1127 = vunpack.c.l.b16 %v1090
    %v1128 = vunpack.c.l.b16 %v1091
    %v1129 = vpack.c.b16 %v1114, %v1113
    %v1130 = vpack.c.b16 %v1116, %v1115
    %v1131 = vpack.c.b16 %v1118, %v1117
    %v1132 = vpack.c.b16 %v1120, %v1119
    %v1133 = vpack.c.b16 %v1122, %v1121
    %v1134 = vpack.c.b16 %v1124, %v1123
    %v1135 = vpack.c.b16 %v1126, %v1125
    %v1136 = vpack.c.b16 %v1128, %v1127
    %1145 = vmatprep.subr.bf16.mxu0 0
    %1146 = vmatpush1.bf16.msra.mxu0 %v1129
    %1147 = vmatprep.subr.bf16.mxu0 0
    %1148 = vmatpush1.bf16.msra.mxu0 %v1130
    %1149 = vmatprep.subr.bf16.mxu0 0
    %1150 = vmatpush1.bf16.msra.mxu0 %v1131
    %1151 = vmatprep.subr.bf16.mxu0 0
    %1152 = vmatpush1.bf16.msra.mxu0 %v1132
    %1153 = vmatprep.subr.bf16.mxu0 0
    %1154 = vmatpush1.bf16.msra.mxu0 %v1133
    %1155 = vmatprep.subr.bf16.mxu0 0
    %1156 = vmatpush1.bf16.msra.mxu0 %v1134
    %1157 = vmatprep.subr.bf16.mxu0 0
    %1158 = vmatpush1.bf16.msra.mxu0 %v1135
    %1159 = vmatprep.subr.bf16.mxu0 0
    %1160 = vmatpush1.bf16.msra.mxu0 %v1136
    %1161 = vmatprep.subr.bf16.mxu0 0
    %1162 = vmatpush1.bf16.msra.mxu0 0
    %1163 = vmatprep.subr.bf16.mxu0 0
    %1164 = vmatpush1.bf16.msra.mxu0 0
    %1165 = vmatprep.subr.bf16.mxu0 0
    %1166 = vmatpush1.bf16.msra.mxu0 0
    %1167 = vmatprep.subr.bf16.mxu0 0
    %1168 = vmatpush1.bf16.msra.mxu0 0
    %1169 = vmatprep.subr.bf16.mxu0 0
    %1170 = vmatpush1.bf16.msra.mxu0 0
    %1171 = vmatprep.subr.bf16.mxu0 0
    %1172 = vmatpush1.bf16.msra.mxu0 0
    %1173 = vmatprep.subr.bf16.mxu0 0
    %1174 = vmatpush1.bf16.msra.mxu0 0
    %1175 = vmatprep.subr.bf16.mxu0 0
    %1176 = vmatpush1.bf16.msra.mxu0 0
    %1177 = vmatprep.mubr.bf16.mxu0 0
    %1178 = vmatmul.mubr.bf16.gmra.mrb[0].mxu0 %v956
    %v1179 = vpop.f32.mrb[0].mxu0
    %v1180 = vadd.f32 %v1096, %v1179
    %v1181 = vpop.f32.mrb[0].mxu0
    %v1182 = vpop.f32.mrb[0].mxu0
    %v1183 = vadd.f32 %v1096, %v1182
    %v1184 = vpop.f32.mrb[0].mxu0
    %1185 = vmatprep.mubr.bf16.mxu0 0
    %1186 = vmatmul.mubr.bf16.gmra.mrb[0].mxu0 %v957
    %v1187 = vpop.f32.mrb[0].mxu0
    %v1188 = vadd.f32 %v1096, %v1187
    %v1189 = vpop.f32.mrb[0].mxu0
    %v1190 = vpop.f32.mrb[0].mxu0
    %v1191 = vadd.f32 %v1096, %v1190
    %v1192 = vpop.f32.mrb[0].mxu0
    %1193 = vdwg.mxu0
    %v1194 = vld [vmem:[#allocation2 + $0x180] sm:$0xf]
    %v1195 = vld [vmem:[#allocation2 + $0x184] sm:$0xf]
    %v1196 = vld [vmem:[#allocation2 + $0x188] sm:$0xf]
    %v1197 = vld [vmem:[#allocation2 + $0x18c] sm:$0xf]
    %v1198 = vld [vmem:[#allocation2 + $0x190] sm:$0xf]
    %v1199 = vld [vmem:[#allocation2 + $0x194] sm:$0xf]
    %v1200 = vld [vmem:[#allocation2 + $0x198] sm:$0xf]
    %v1201 = vld [vmem:[#allocation2 + $0x19c] sm:$0xf]
    %v1202 = vld [vmem:[#allocation2 + $0x1a0] sm:$0xf]
    %v1203 = vld [vmem:[#allocation2 + $0x1a4] sm:$0xf]
    %v1204 = vld [vmem:[#allocation2 + $0x1a8] sm:$0xf]
    %v1205 = vld [vmem:[#allocation2 + $0x1ac] sm:$0xf]
    %v1206 = vld [vmem:[#allocation2 + $0x1b0] sm:$0xf]
    %v1207 = vld [vmem:[#allocation2 + $0x1b4] sm:$0xf]
    %v1208 = vld [vmem:[#allocation2 + $0x1b8] sm:$0xf]
    %v1209 = vld [vmem:[#allocation2 + $0x1bc] sm:$0xf]
    %v1210 = vld [vmem:[#allocation5 + $0x32] sm:$0x1]
    %v1211 = vlaneseq
    %v1212 = vshrl.u32 %v1211, 7
    %v1213 = vsub.s32 0, %v1212
    %v1214 = vrot.slane %v1210, %v1213
    %v1231 = vunpack.c.l.b16 %v1194
    %v1232 = vunpack.c.l.b16 %v1195
    %v1233 = vunpack.c.l.b16 %v1196
    %v1234 = vunpack.c.l.b16 %v1197
    %v1235 = vunpack.c.l.b16 %v1198
    %v1236 = vunpack.c.l.b16 %v1199
    %v1237 = vunpack.c.l.b16 %v1200
    %v1238 = vunpack.c.l.b16 %v1201
    %v1239 = vunpack.c.l.b16 %v1202
    %v1240 = vunpack.c.l.b16 %v1203
    %v1241 = vunpack.c.l.b16 %v1204
    %v1242 = vunpack.c.l.b16 %v1205
    %v1243 = vunpack.c.l.b16 %v1206
    %v1244 = vunpack.c.l.b16 %v1207
    %v1245 = vunpack.c.l.b16 %v1208
    %v1246 = vunpack.c.l.b16 %v1209
    %v1247 = vpack.c.b16 %v1232, %v1231
    %v1248 = vpack.c.b16 %v1234, %v1233
    %v1249 = vpack.c.b16 %v1236, %v1235
    %v1250 = vpack.c.b16 %v1238, %v1237
    %v1251 = vpack.c.b16 %v1240, %v1239
    %v1252 = vpack.c.b16 %v1242, %v1241
    %v1253 = vpack.c.b16 %v1244, %v1243
    %v1254 = vpack.c.b16 %v1246, %v1245
    %1263 = vmatprep.subr.bf16.mxu0 0
    %1264 = vmatpush1.bf16.msra.mxu0 %v1247
    %1265 = vmatprep.subr.bf16.mxu0 0
    %1266 = vmatpush1.bf16.msra.mxu0 %v1248
    %1267 = vmatprep.subr.bf16.mxu0 0
    %1268 = vmatpush1.bf16.msra.mxu0 %v1249
    %1269 = vmatprep.subr.bf16.mxu0 0
    %1270 = vmatpush1.bf16.msra.mxu0 %v1250
    %1271 = vmatprep.subr.bf16.mxu0 0
    %1272 = vmatpush1.bf16.msra.mxu0 %v1251
    %1273 = vmatprep.subr.bf16.mxu0 0
    %1274 = vmatpush1.bf16.msra.mxu0 %v1252
    %1275 = vmatprep.subr.bf16.mxu0 0
    %1276 = vmatpush1.bf16.msra.mxu0 %v1253
    %1277 = vmatprep.subr.bf16.mxu0 0
    %1278 = vmatpush1.bf16.msra.mxu0 %v1254
    %1279 = vmatprep.subr.bf16.mxu0 0
    %1280 = vmatpush1.bf16.msra.mxu0 0
    %1281 = vmatprep.subr.bf16.mxu0 0
    %1282 = vmatpush1.bf16.msra.mxu0 0
    %1283 = vmatprep.subr.bf16.mxu0 0
    %1284 = vmatpush1.bf16.msra.mxu0 0
    %1285 = vmatprep.subr.bf16.mxu0 0
    %1286 = vmatpush1.bf16.msra.mxu0 0
    %1287 = vmatprep.subr.bf16.mxu0 0
    %1288 = vmatpush1.bf16.msra.mxu0 0
    %1289 = vmatprep.subr.bf16.mxu0 0
    %1290 = vmatpush1.bf16.msra.mxu0 0
    %1291 = vmatprep.subr.bf16.mxu0 0
    %1292 = vmatpush1.bf16.msra.mxu0 0
    %1293 = vmatprep.subr.bf16.mxu0 0
    %1294 = vmatpush1.bf16.msra.mxu0 0
    %1295 = vmatprep.mubr.bf16.mxu0 0
    %1296 = vmatmul.mubr.bf16.gmra.mrb[0].mxu0 %v956
    %v1297 = vpop.f32.mrb[0].mxu0
    %v1298 = vadd.f32 %v1214, %v1297
    %v1299 = vpop.f32.mrb[0].mxu0
    %v1300 = vpop.f32.mrb[0].mxu0
    %v1301 = vadd.f32 %v1214, %v1300
    %v1302 = vpop.f32.mrb[0].mxu0
    %1303 = vmatprep.mubr.bf16.mxu0 0
    %1304 = vmatmul.mubr.bf16.gmra.mrb[0].mxu0 %v957
    %v1305 = vpop.f32.mrb[0].mxu0
    %v1306 = vadd.f32 %v1214, %v1305
    %v1307 = vpop.f32.mrb[0].mxu0
    %v1308 = vpop.f32.mrb[0].mxu0
    %v1309 = vadd.f32 %v1214, %v1308
    %v1310 = vpop.f32.mrb[0].mxu0
    %1311 = vdwg.mxu0
    %v1312 = vpack.c.bf16 %v1065, %v1062
    %v1313 = vpack.c.bf16 %v1073, %v1070
    %v1314 = vpack.c.bf16 %v1183, %v1180
    %v1315 = vpack.c.bf16 %v1191, %v1188
    %v1316 = vpack.c.bf16 %v1301, %v1298
    %v1317 = vpack.c.bf16 %v1309, %v1306
    %1318 = vmatprep.subr.bf16.mxu0 0
    %1319 = vmatpush1.bf16.xpose.msra.mxu0 %v1314
    %1320 = vmatprep.subr.bf16.mxu0 0
    %1321 = vmatpush1.bf16.xpose.msra.mxu0 0
    %1322 = vmatprep.subr.bf16.mxu0 0
    %1323 = vmatpush1.bf16.xpose.msra.mxu0 0
    %1324 = vmatprep.subr.bf16.mxu0 0
    %1325 = vmatpush1.bf16.xpose.msra.mxu0 0
    %1326 = vmatprep.subr.bf16.mxu0 0
    %1327 = vmatpush1.bf16.xpose.msra.mxu0 0
    %1328 = vmatprep.subr.bf16.mxu0 0
    %1329 = vmatpush1.bf16.xpose.msra.mxu0 0
    %1330 = vmatprep.subr.bf16.mxu0 0
    %1331 = vmatpush1.bf16.xpose.msra.mxu0 0
    %1332 = vmatprep.subr.bf16.mxu0 0
    %1333 = vmatpush1.bf16.xpose.msra.mxu0 0
    %1334 = vmatprep.subr.bf16.mxu0 0
    %1335 = vmatpush1.bf16.xpose.msra.mxu0 0
    %1336 = vmatprep.subr.bf16.mxu0 0
    %1337 = vmatpush1.bf16.xpose.msra.mxu0 0
    %1338 = vmatprep.subr.bf16.mxu0 0
    %1339 = vmatpush1.bf16.xpose.msra.mxu0 0
    %1340 = vmatprep.subr.bf16.mxu0 0
    %1341 = vmatpush1.bf16.xpose.msra.mxu0 0
    %1342 = vmatprep.subr.bf16.mxu0 0
    %1343 = vmatpush1.bf16.xpose.msra.mxu0 0
    %1344 = vmatprep.subr.bf16.mxu0 0
    %1345 = vmatpush1.bf16.xpose.msra.mxu0 0
    %1346 = vmatprep.subr.bf16.mxu0 0
    %1347 = vmatpush1.bf16.xpose.msra.mxu0 0
    %1348 = vmatprep.subr.bf16.mxu0 0
    %1349 = vmatpush1.bf16.xpose.msra.mxu0 0
    %1350 = vmatprep.mubr.bf16.mxu0 0
    %1351 = vmatmul.mubr.bf16.gmra.mrb[0].mxu0 %v1312
    %v1352 = vpop.f32.mrb[0].mxu0
    %v1353 = vadd.f32 %v185, %v1352
    %v1354 = vpop.f32.mrb[0].mxu0
    %v1355 = vpop.f32.mrb[0].mxu0
    %v1356 = vadd.f32 %v186, %v1355
    %v1357 = vpop.f32.mrb[0].mxu0
    %1358 = vdwg.mxu0
    %1359 = vmatprep.subr.bf16.mxu0 0
    %1360 = vmatpush1.bf16.xpose.msra.mxu0 %v1315
    %1361 = vmatprep.subr.bf16.mxu0 0
    %1362 = vmatpush1.bf16.xpose.msra.mxu0 0
    %1363 = vmatprep.subr.bf16.mxu0 0
    %1364 = vmatpush1.bf16.xpose.msra.mxu0 0
    %1365 = vmatprep.subr.bf16.mxu0 0
    %1366 = vmatpush1.bf16.xpose.msra.mxu0 0
    %1367 = vmatprep.subr.bf16.mxu0 0
    %1368 = vmatpush1.bf16.xpose.msra.mxu0 0
    %1369 = vmatprep.subr.bf16.mxu0 0
    %1370 = vmatpush1.bf16.xpose.msra.mxu0 0
    %1371 = vmatprep.subr.bf16.mxu0 0
    %1372 = vmatpush1.bf16.xpose.msra.mxu0 0
    %1373 = vmatprep.subr.bf16.mxu0 0
    %1374 = vmatpush1.bf16.xpose.msra.mxu0 0
    %1375 = vmatprep.subr.bf16.mxu0 0
    %1376 = vmatpush1.bf16.xpose.msra.mxu0 0
    %1377 = vmatprep.subr.bf16.mxu0 0
    %1378 = vmatpush1.bf16.xpose.msra.mxu0 0
    %1379 = vmatprep.subr.bf16.mxu0 0
    %1380 = vmatpush1.bf16.xpose.msra.mxu0 0
    %1381 = vmatprep.subr.bf16.mxu0 0
    %1382 = vmatpush1.bf16.xpose.msra.mxu0 0
    %1383 = vmatprep.subr.bf16.mxu0 0
    %1384 = vmatpush1.bf16.xpose.msra.mxu0 0
    %1385 = vmatprep.subr.bf16.mxu0 0
    %1386 = vmatpush1.bf16.xpose.msra.mxu0 0
    %1387 = vmatprep.subr.bf16.mxu0 0
    %1388 = vmatpush1.bf16.xpose.msra.mxu0 0
    %1389 = vmatprep.subr.bf16.mxu0 0
    %1390 = vmatpush1.bf16.xpose.msra.mxu0 0
    %1391 = vmatprep.mubr.bf16.mxu0 0
    %1392 = vmatmul.mubr.bf16.gmra.mrb[0].mxu0 %v1313
    %v1393 = vpop.f32.mrb[0].mxu0
    %v1394 = vadd.f32 %v185, %v1393
    %v1395 = vpop.f32.mrb[0].mxu0
    %v1396 = vpop.f32.mrb[0].mxu0
    %v1397 = vadd.f32 %v186, %v1396
    %v1398 = vpop.f32.mrb[0].mxu0
    %1399 = vdwg.mxu0
    %v1400 = vsel %vm631, %v1353, -inf
    %1401 = vmax.xlane.f32.xlu0 %v1400
    %v1402 = vpop.xlane.xlu0 %1401
    %v1403 = vsel %vm631, %v1356, -inf
    %1404 = vmax.xlane.f32.xlu0 %v1403
    %v1405 = vpop.xlane.xlu0 %1404
    %v1406 = vsel %vm631, %v1394, -inf
    %1407 = vmax.xlane.f32.xlu0 %v1406
    %v1408 = vpop.xlane.xlu0 %1407
    %v1409 = vsel %vm631, %v1397, -inf
    %1410 = vmax.xlane.f32.xlu0 %v1409
    %v1411 = vpop.xlane.xlu0 %1410
    %v1412 = vsub.f32 %v1353, %v1402
    %v1413 = vsub.f32 %v1356, %v1405
    %v1414 = vsub.f32 %v1394, %v1408
    %v1415 = vsub.f32 %v1397, %v1411
    %v1416 = vmul.f32 %v1412, 1.442695
    %v1417 = vpow.pop %v1416
    %v1418 = vmul.f32 %v1413, 1.442695
    %v1419 = vpow.pop %v1418
    %v1420 = vmul.f32 %v1414, 1.442695
    %v1421 = vpow.pop %v1420
    %v1422 = vmul.f32 %v1415, 1.442695
    %v1423 = vpow.pop %v1422
    %v1424 = vsel %vm631, %v1417, 0.0
    %1425 = vadd.xlane.f32.xlu0 %v1424
    %v1426 = vpop.xlane.xlu0 %1425
    %v1427 = vsel %vm631, %v1419, 0.0
    %1428 = vadd.xlane.f32.xlu0 %v1427
    %v1429 = vpop.xlane.xlu0 %1428
    %v1430 = vsel %vm631, %v1421, 0.0
    %1431 = vadd.xlane.f32.xlu0 %v1430
    %v1432 = vpop.xlane.xlu0 %1431
    %v1433 = vsel %vm631, %v1423, 0.0
    %1434 = vadd.xlane.f32.xlu0 %v1433
    %v1435 = vpop.xlane.xlu0 %1434
    %v1436 = vrcp.pop %v1426
    %v1437 = vmul.f32 %v1417, %v1436
    %v1438 = vrcp.pop %v1429
    %v1439 = vmul.f32 %v1419, %v1438
    %v1440 = vrcp.pop %v1432
    %v1441 = vmul.f32 %v1421, %v1440
    %v1442 = vrcp.pop %v1435
    %v1443 = vmul.f32 %v1423, %v1442
    %v1444 = vpack.c.bf16 %v1439, %v1437
    %v1445 = vpack.c.bf16 %v1443, %v1441
    %v1447 = vsel %vm631, %v1444, 0
    %1449 = vmatprep.subr.bf16.mxu0 0
    %1450 = vmatpush1.bf16.msra.mxu0 %v1316
    %1451 = vmatprep.subr.bf16.mxu0 0
    %1452 = vmatpush1.bf16.msra.mxu0 0
    %1453 = vmatprep.subr.bf16.mxu0 0
    %1454 = vmatpush1.bf16.msra.mxu0 0
    %1455 = vmatprep.subr.bf16.mxu0 0
    %1456 = vmatpush1.bf16.msra.mxu0 0
    %1457 = vmatprep.subr.bf16.mxu0 0
    %1458 = vmatpush1.bf16.msra.mxu0 0
    %1459 = vmatprep.subr.bf16.mxu0 0
    %1460 = vmatpush1.bf16.msra.mxu0 0
    %1461 = vmatprep.subr.bf16.mxu0 0
    %1462 = vmatpush1.bf16.msra.mxu0 0
    %1463 = vmatprep.subr.bf16.mxu0 0
    %1464 = vmatpush1.bf16.msra.mxu0 0
    %1465 = vmatprep.subr.bf16.mxu0 0
    %1466 = vmatpush1.bf16.msra.mxu0 0
    %1467 = vmatprep.subr.bf16.mxu0 0
    %1468 = vmatpush1.bf16.msra.mxu0 0
    %1469 = vmatprep.subr.bf16.mxu0 0
    %1470 = vmatpush1.bf16.msra.mxu0 0
    %1471 = vmatprep.subr.bf16.mxu0 0
    %1472 = vmatpush1.bf16.msra.mxu0 0
    %1473 = vmatprep.subr.bf16.mxu0 0
    %1474 = vmatpush1.bf16.msra.mxu0 0
    %1475 = vmatprep.subr.bf16.mxu0 0
    %1476 = vmatpush1.bf16.msra.mxu0 0
    %1477 = vmatprep.subr.bf16.mxu0 0
    %1478 = vmatpush1.bf16.msra.mxu0 0
    %1479 = vmatprep.subr.bf16.mxu0 0
    %1480 = vmatpush1.bf16.msra.mxu0 0
    %1481 = vmatprep.mubr.bf16.mxu0 0
    %1482 = vmatmul.mubr.bf16.gmra.mrb[0].mxu0 %v1447
    %v1483 = vpop.f32.mrb[0].mxu0
    %v1484 = vadd.f32 0.0, %v1483
    %v1485 = vpop.f32.mrb[0].mxu0
    %v1486 = vpop.f32.mrb[0].mxu0
    %v1487 = vadd.f32 0.0, %v1486
    %v1488 = vpop.f32.mrb[0].mxu0
    %1489 = vdwg.mxu0
    %v1491 = vsel %vm631, %v1445, 0
    %1493 = vmatprep.subr.bf16.mxu0 0
    %1494 = vmatpush1.bf16.msra.mxu0 %v1317
    %1495 = vmatprep.subr.bf16.mxu0 0
    %1496 = vmatpush1.bf16.msra.mxu0 0
    %1497 = vmatprep.subr.bf16.mxu0 0
    %1498 = vmatpush1.bf16.msra.mxu0 0
    %1499 = vmatprep.subr.bf16.mxu0 0
    %1500 = vmatpush1.bf16.msra.mxu0 0
    %1501 = vmatprep.subr.bf16.mxu0 0
    %1502 = vmatpush1.bf16.msra.mxu0 0
    %1503 = vmatprep.subr.bf16.mxu0 0
    %1504 = vmatpush1.bf16.msra.mxu0 0
    %1505 = vmatprep.subr.bf16.mxu0 0
    %1506 = vmatpush1.bf16.msra.mxu0 0
    %1507 = vmatprep.subr.bf16.mxu0 0
    %1508 = vmatpush1.bf16.msra.mxu0 0
    %1509 = vmatprep.subr.bf16.mxu0 0
    %1510 = vmatpush1.bf16.msra.mxu0 0
    %1511 = vmatprep.subr.bf16.mxu0 0
    %1512 = vmatpush1.bf16.msra.mxu0 0
    %1513 = vmatprep.subr.bf16.mxu0 0
    %1514 = vmatpush1.bf16.msra.mxu0 0
    %1515 = vmatprep.subr.bf16.mxu0 0
    %1516 = vmatpush1.bf16.msra.mxu0 0
    %1517 = vmatprep.subr.bf16.mxu0 0
    %1518 = vmatpush1.bf16.msra.mxu0 0
    %1519 = vmatprep.subr.bf16.mxu0 0
    %1520 = vmatpush1.bf16.msra.mxu0 0
    %1521 = vmatprep.subr.bf16.mxu0 0
    %1522 = vmatpush1.bf16.msra.mxu0 0
    %1523 = vmatprep.subr.bf16.mxu0 0
    %1524 = vmatpush1.bf16.msra.mxu0 0
    %1525 = vmatprep.mubr.bf16.mxu0 0
    %1526 = vmatmul.mubr.bf16.gmra.mrb[0].mxu0 %v1491
    %v1527 = vpop.f32.mrb[0].mxu0
    %v1528 = vadd.f32 0.0, %v1527
    %v1529 = vpop.f32.mrb[0].mxu0
    %v1530 = vpop.f32.mrb[0].mxu0
    %v1531 = vadd.f32 0.0, %v1530
    %v1532 = vpop.f32.mrb[0].mxu0
    %1533 = vdwg.mxu0
    %v1534 = vpack.c.bf16 %v1487, %v1484
    %v1535 = vpack.c.bf16 %v1531, %v1528
    %v1536 = vld [vmem:[#allocation2 + $0x1c0] sm:$0xf]
    %v1537 = vld [vmem:[#allocation2 + $0x1c4] sm:$0xf]
    %v1538 = vld [vmem:[#allocation2 + $0x1c8] sm:$0xf]
    %v1539 = vld [vmem:[#allocation2 + $0x1cc] sm:$0xf]
    %v1540 = vld [vmem:[#allocation2 + $0x1d0] sm:$0xf]
    %v1541 = vld [vmem:[#allocation2 + $0x1d4] sm:$0xf]
    %v1542 = vld [vmem:[#allocation2 + $0x1d8] sm:$0xf]
    %v1543 = vld [vmem:[#allocation2 + $0x1dc] sm:$0xf]
    %v1544 = vld [vmem:[#allocation2 + $0x1e0] sm:$0xf]
    %v1545 = vld [vmem:[#allocation2 + $0x1e4] sm:$0xf]
    %v1546 = vld [vmem:[#allocation2 + $0x1e8] sm:$0xf]
    %v1547 = vld [vmem:[#allocation2 + $0x1ec] sm:$0xf]
    %v1548 = vld [vmem:[#allocation2 + $0x1f0] sm:$0xf]
    %v1549 = vld [vmem:[#allocation2 + $0x1f4] sm:$0xf]
    %v1550 = vld [vmem:[#allocation2 + $0x1f8] sm:$0xf]
    %v1551 = vld [vmem:[#allocation2 + $0x1fc] sm:$0xf]
    %v1552 = vld [vmem:[#allocation5 + $0x33] sm:$0x1]
    %v1553 = vlaneseq
    %v1554 = vshrl.u32 %v1553, 7
    %v1555 = vsub.s32 0, %v1554
    %v1556 = vrot.slane %v1552, %v1555
    %v1573 = vunpack.c.l.b16 %v1536
    %v1574 = vunpack.c.l.b16 %v1537
    %v1575 = vunpack.c.l.b16 %v1538
    %v1576 = vunpack.c.l.b16 %v1539
    %v1577 = vunpack.c.l.b16 %v1540
    %v1578 = vunpack.c.l.b16 %v1541
    %v1579 = vunpack.c.l.b16 %v1542
    %v1580 = vunpack.c.l.b16 %v1543
    %v1581 = vunpack.c.l.b16 %v1544
    %v1582 = vunpack.c.l.b16 %v1545
    %v1583 = vunpack.c.l.b16 %v1546
    %v1584 = vunpack.c.l.b16 %v1547
    %v1585 = vunpack.c.l.b16 %v1548
    %v1586 = vunpack.c.l.b16 %v1549
    %v1587 = vunpack.c.l.b16 %v1550
    %v1588 = vunpack.c.l.b16 %v1551
    %v1589 = vpack.c.b16 %v1574, %v1573
    %v1590 = vpack.c.b16 %v1576, %v1575
    %v1591 = vpack.c.b16 %v1578, %v1577
    %v1592 = vpack.c.b16 %v1580, %v1579
    %v1593 = vpack.c.b16 %v1582, %v1581
    %v1594 = vpack.c.b16 %v1584, %v1583
    %v1595 = vpack.c.b16 %v1586, %v1585
    %v1596 = vpack.c.b16 %v1588, %v1587
    %1605 = vmatprep.subr.bf16.mxu0 0
    %1606 = vmatpush1.bf16.msra.mxu0 %v1589
    %1607 = vmatprep.subr.bf16.mxu0 0
    %1608 = vmatpush1.bf16.msra.mxu0 %v1590
    %1609 = vmatprep.subr.bf16.mxu0 0
    %1610 = vmatpush1.bf16.msra.mxu0 %v1591
    %1611 = vmatprep.subr.bf16.mxu0 0
    %1612 = vmatpush1.bf16.msra.mxu0 %v1592
    %1613 = vmatprep.subr.bf16.mxu0 0
    %1614 = vmatpush1.bf16.msra.mxu0 %v1593
    %1615 = vmatprep.subr.bf16.mxu0 0
    %1616 = vmatpush1.bf16.msra.mxu0 %v1594
    %1617 = vmatprep.subr.bf16.mxu0 0
    %1618 = vmatpush1.bf16.msra.mxu0 %v1595
    %1619 = vmatprep.subr.bf16.mxu0 0
    %1620 = vmatpush1.bf16.msra.mxu0 %v1596
    %1621 = vmatprep.subr.bf16.mxu0 0
    %1622 = vmatpush1.bf16.msra.mxu0 0
    %1623 = vmatprep.subr.bf16.mxu0 0
    %1624 = vmatpush1.bf16.msra.mxu0 0
    %1625 = vmatprep.subr.bf16.mxu0 0
    %1626 = vmatpush1.bf16.msra.mxu0 0
    %1627 = vmatprep.subr.bf16.mxu0 0
    %1628 = vmatpush1.bf16.msra.mxu0 0
    %1629 = vmatprep.subr.bf16.mxu0 0
    %1630 = vmatpush1.bf16.msra.mxu0 0
    %1631 = vmatprep.subr.bf16.mxu0 0
    %1632 = vmatpush1.bf16.msra.mxu0 0
    %1633 = vmatprep.subr.bf16.mxu0 0
    %1634 = vmatpush1.bf16.msra.mxu0 0
    %1635 = vmatprep.subr.bf16.mxu0 0
    %1636 = vmatpush1.bf16.msra.mxu0 0
    %1637 = vmatprep.mubr.bf16.mxu0 0
    %1638 = vmatmul.mubr.bf16.gmra.mrb[0].mxu0 %v1534
    %v1639 = vpop.f32.mrb[0].mxu0
    %v1640 = vadd.f32 %v1556, %v1639
    %v1641 = vpop.f32.mrb[0].mxu0
    %v1642 = vpop.f32.mrb[0].mxu0
    %v1643 = vadd.f32 %v1556, %v1642
    %v1644 = vpop.f32.mrb[0].mxu0
    %1645 = vmatprep.mubr.bf16.mxu0 0
    %1646 = vmatmul.mubr.bf16.gmra.mrb[0].mxu0 %v1535
    %v1647 = vpop.f32.mrb[0].mxu0
    %v1648 = vadd.f32 %v1556, %v1647
    %v1649 = vpop.f32.mrb[0].mxu0
    %v1650 = vpop.f32.mrb[0].mxu0
    %v1651 = vadd.f32 %v1556, %v1650
    %v1652 = vpop.f32.mrb[0].mxu0
    %1653 = vdwg.mxu0
    %v1654 = vld [vmem:[#allocation5 + $0x34] sm:$0x1]
    %v1655 = vld [vmem:[#allocation5 + $0x35] sm:$0x1]
    %v1656 = vadd.f32 %v952, %v1640
    %v1657 = vadd.f32 %v953, %v1643
    %v1658 = vadd.f32 %v954, %v1648
    %v1659 = vadd.f32 %v955, %v1651
    %1660 = vadd.xlane.f32.xlu0 %v1656
    %v1661 = vpop.xlane.xlu0 %1660
    %1662 = vadd.xlane.f32.xlu0 %v1657
    %v1663 = vpop.xlane.xlu0 %1662
    %1664 = vadd.xlane.f32.xlu0 %v1658
    %v1665 = vpop.xlane.xlu0 %1664
    %1666 = vadd.xlane.f32.xlu0 %v1659
    %v1667 = vpop.xlane.xlu0 %1666
    %v1668 = vmul.f32 %v1661, 0.0625
    %v1669 = vmul.f32 %v1663, 0.0625
    %v1670 = vmul.f32 %v1665, 0.0625
    %v1671 = vmul.f32 %v1667, 0.0625
    %v1672 = vsub.f32 %v1656, %v1668
    %v1673 = vsub.f32 %v1657, %v1669
    %v1674 = vsub.f32 %v1658, %v1670
    %v1675 = vsub.f32 %v1659, %v1671
    %v1676 = vmul.f32 %v1672, %v179
    %v1677 = vmul.f32 %v1673, %v179
    %v1678 = vmul.f32 %v1674, %v179
    %v1679 = vmul.f32 %v1675, %v179
    %v1680 = vmul.f32 %v1676, %v1676
    %v1681 = vmul.f32 %v1677, %v1677
    %v1682 = vmul.f32 %v1678, %v1678
    %v1683 = vmul.f32 %v1679, %v1679
    %1684 = vadd.xlane.f32.xlu0 %v1680
    %v1685 = vpop.xlane.xlu0 %1684
    %1686 = vadd.xlane.f32.xlu0 %v1681
    %v1687 = vpop.xlane.xlu0 %1686
    %1688 = vadd.xlane.f32.xlu0 %v1682
    %v1689 = vpop.xlane.xlu0 %1688
    %1690 = vadd.xlane.f32.xlu0 %v1683
    %v1691 = vpop.xlane.xlu0 %1690
    %v1692 = vmul.f32 %v1685, 0.0625
    %v1693 = vmul.f32 %v1687, 0.0625
    %v1694 = vmul.f32 %v1689, 0.0625
    %v1695 = vmul.f32 %v1691, 0.0625
    %v1696 = vadd.f32 %v1692, 1e-05
    %v1697 = vadd.f32 %v1693, 1e-05
    %v1698 = vadd.f32 %v1694, 1e-05
    %v1699 = vadd.f32 %v1695, 1e-05
    %v1700 = vrsqrt.pop %v1696
    %v1701 = vrsqrt.pop %v1697
    %v1702 = vrsqrt.pop %v1698
    %v1703 = vrsqrt.pop %v1699
    %v1704 = vmul.f32 %v1676, %v1700
    %v1705 = vmul.f32 %v1677, %v1701
    %v1706 = vmul.f32 %v1678, %v1702
    %v1707 = vmul.f32 %v1679, %v1703
    %v1708 = vlaneseq
    %v1709 = vshrl.u32 %v1708, 7
    %v1710 = vsub.s32 0, %v1709
    %v1711 = vrot.slane %v1654, %v1710
    %v1712 = vmul.f32 %v1704, %v1711
    %v1713 = vmul.f32 %v1705, %v1711
    %v1714 = vmul.f32 %v1706, %v1711
    %v1715 = vmul.f32 %v1707, %v1711
    %v1716 = vlaneseq
    %v1717 = vshrl.u32 %v1716, 7
    %v1718 = vsub.s32 0, %v1717
    %v1719 = vrot.slane %v1655, %v1718
    %v1720 = vadd.f32 %v1712, %v1719
    %v1721 = vadd.f32 %v1713, %v1719
    %v1722 = vadd.f32 %v1714, %v1719
    %v1723 = vadd.f32 %v1715, %v1719
    %v1724 = vpack.c.bf16 %v1721, %v1720
    %v1725 = vpack.c.bf16 %v1723, %v1722
    %v1726 = vld [vmem:[#allocation2 + $0x200] sm:$0xf]
    %v1727 = vld [vmem:[#allocation2 + $0x204] sm:$0xf]
    %v1728 = vld [vmem:[#allocation2 + $0x208] sm:$0xf]
    %v1729 = vld [vmem:[#allocation2 + $0x20c] sm:$0xf]
    %v1730 = vld [vmem:[#allocation2 + $0x210] sm:$0xf]
    %v1731 = vld [vmem:[#allocation2 + $0x214] sm:$0xf]
    %v1732 = vld [vmem:[#allocation2 + $0x218] sm:$0xf]
    %v1733 = vld [vmem:[#allocation2 + $0x21c] sm:$0xf]
    %v1734 = vld [vmem:[#allocation2 + $0x220] sm:$0xf]
    %v1735 = vld [vmem:[#allocation2 + $0x224] sm:$0xf]
    %v1736 = vld [vmem:[#allocation2 + $0x228] sm:$0xf]
    %v1737 = vld [vmem:[#allocation2 + $0x22c] sm:$0xf]
    %v1738 = vld [vmem:[#allocation2 + $0x230] sm:$0xf]
    %v1739 = vld [vmem:[#allocation2 + $0x234] sm:$0xf]
    %v1740 = vld [vmem:[#allocation2 + $0x238] sm:$0xf]
    %v1741 = vld [vmem:[#allocation2 + $0x23c] sm:$0xf]
    %v1742 = vld [vmem:[#allocation5 + $0x38] sm:$0x1]
    %v1743 = vlaneseq
    %v1744 = vshrl.u32 %v1743, 7
    %v1745 = vsub.s32 0, %v1744
    %v1746 = vrot.slane %v1742, %v1745
    %v1763 = vunpack.c.l.b16 %v1726
    %v1764 = vunpack.c.l.b16 %v1727
    %v1765 = vunpack.c.l.b16 %v1728
    %v1766 = vunpack.c.l.b16 %v1729
    %v1767 = vunpack.c.l.b16 %v1730
    %v1768 = vunpack.c.l.b16 %v1731
    %v1769 = vunpack.c.l.b16 %v1732
    %v1770 = vunpack.c.l.b16 %v1733
    %v1771 = vunpack.c.l.b16 %v1734
    %v1772 = vunpack.c.l.b16 %v1735
    %v1773 = vunpack.c.l.b16 %v1736
    %v1774 = vunpack.c.l.b16 %v1737
    %v1775 = vunpack.c.l.b16 %v1738
    %v1776 = vunpack.c.l.b16 %v1739
    %v1777 = vunpack.c.l.b16 %v1740
    %v1778 = vunpack.c.l.b16 %v1741
    %v1779 = vpack.c.b16 %v1764, %v1763
    %v1780 = vpack.c.b16 %v1766, %v1765
    %v1781 = vpack.c.b16 %v1768, %v1767
    %v1782 = vpack.c.b16 %v1770, %v1769
    %v1783 = vpack.c.b16 %v1772, %v1771
    %v1784 = vpack.c.b16 %v1774, %v1773
    %v1785 = vpack.c.b16 %v1776, %v1775
    %v1786 = vpack.c.b16 %v1778, %v1777
    %1795 = vmatprep.subr.bf16.mxu0 0
    %1796 = vmatpush1.bf16.msra.mxu0 %v1779
    %1797 = vmatprep.subr.bf16.mxu0 0
    %1798 = vmatpush1.bf16.msra.mxu0 %v1780
    %1799 = vmatprep.subr.bf16.mxu0 0
    %1800 = vmatpush1.bf16.msra.mxu0 %v1781
    %1801 = vmatprep.subr.bf16.mxu0 0
    %1802 = vmatpush1.bf16.msra.mxu0 %v1782
    %1803 = vmatprep.subr.bf16.mxu0 0
    %1804 = vmatpush1.bf16.msra.mxu0 %v1783
    %1805 = vmatprep.subr.bf16.mxu0 0
    %1806 = vmatpush1.bf16.msra.mxu0 %v1784
    %1807 = vmatprep.subr.bf16.mxu0 0
    %1808 = vmatpush1.bf16.msra.mxu0 %v1785
    %1809 = vmatprep.subr.bf16.mxu0 0
    %1810 = vmatpush1.bf16.msra.mxu0 %v1786
    %1811 = vmatprep.subr.bf16.mxu0 0
    %1812 = vmatpush1.bf16.msra.mxu0 0
    %1813 = vmatprep.subr.bf16.mxu0 0
    %1814 = vmatpush1.bf16.msra.mxu0 0
    %1815 = vmatprep.subr.bf16.mxu0 0
    %1816 = vmatpush1.bf16.msra.mxu0 0
    %1817 = vmatprep.subr.bf16.mxu0 0
    %1818 = vmatpush1.bf16.msra.mxu0 0
    %1819 = vmatprep.subr.bf16.mxu0 0
    %1820 = vmatpush1.bf16.msra.mxu0 0
    %1821 = vmatprep.subr.bf16.mxu0 0
    %1822 = vmatpush1.bf16.msra.mxu0 0
    %1823 = vmatprep.subr.bf16.mxu0 0
    %1824 = vmatpush1.bf16.msra.mxu0 0
    %1825 = vmatprep.subr.bf16.mxu0 0
    %1826 = vmatpush1.bf16.msra.mxu0 0
    %1827 = vmatprep.mubr.bf16.mxu0 0
    %1828 = vmatmul.mubr.bf16.gmra.mrb[0].mxu0 %v1724
    %v1829 = vpop.f32.mrb[0].mxu0
    %v1830 = vadd.f32 %v1746, %v1829
    %v1831 = vpop.f32.mrb[0].mxu0
    %v1832 = vpop.f32.mrb[0].mxu0
    %v1833 = vadd.f32 %v1746, %v1832
    %v1834 = vpop.f32.mrb[0].mxu0
    %1835 = vmatprep.mubr.bf16.mxu0 0
    %1836 = vmatmul.mubr.bf16.gmra.mrb[0].mxu0 %v1725
    %v1837 = vpop.f32.mrb[0].mxu0
    %v1838 = vadd.f32 %v1746, %v1837
    %v1839 = vpop.f32.mrb[0].mxu0
    %v1840 = vpop.f32.mrb[0].mxu0
    %v1841 = vadd.f32 %v1746, %v1840
    %v1842 = vpop.f32.mrb[0].mxu0
    %1843 = vdwg.mxu0
    %v1844 = vmax.f32 %v1830, 0.0
    %v1845 = vmax.f32 %v1833, 0.0
    %v1846 = vmax.f32 %v1838, 0.0
    %v1847 = vmax.f32 %v1841, 0.0
    %v1848 = vpack.c.bf16 %v1845, %v1844
    %v1849 = vpack.c.bf16 %v1847, %v1846
    %v1850 = vld [vmem:[#allocation2 + $0x240] sm:$0xf]
    %v1851 = vld [vmem:[#allocation2 + $0x244] sm:$0xf]
    %v1852 = vld [vmem:[#allocation2 + $0x248] sm:$0xf]
    %v1853 = vld [vmem:[#allocation2 + $0x24c] sm:$0xf]
    %v1854 = vld [vmem:[#allocation2 + $0x250] sm:$0xf]
    %v1855 = vld [vmem:[#allocation2 + $0x254] sm:$0xf]
    %v1856 = vld [vmem:[#allocation2 + $0x258] sm:$0xf]
    %v1857 = vld [vmem:[#allocation2 + $0x25c] sm:$0xf]
    %v1858 = vld [vmem:[#allocation2 + $0x260] sm:$0xf]
    %v1859 = vld [vmem:[#allocation2 + $0x264] sm:$0xf]
    %v1860 = vld [vmem:[#allocation2 + $0x268] sm:$0xf]
    %v1861 = vld [vmem:[#allocation2 + $0x26c] sm:$0xf]
    %v1862 = vld [vmem:[#allocation2 + $0x270] sm:$0xf]
    %v1863 = vld [vmem:[#allocation2 + $0x274] sm:$0xf]
    %v1864 = vld [vmem:[#allocation2 + $0x278] sm:$0xf]
    %v1865 = vld [vmem:[#allocation2 + $0x27c] sm:$0xf]
    %v1866 = vld [vmem:[#allocation5 + $0x39] sm:$0x1]
    %v1867 = vlaneseq
    %v1868 = vshrl.u32 %v1867, 7
    %v1869 = vsub.s32 0, %v1868
    %v1870 = vrot.slane %v1866, %v1869
    %v1887 = vunpack.c.l.b16 %v1850
    %v1888 = vunpack.c.l.b16 %v1851
    %v1889 = vunpack.c.l.b16 %v1852
    %v1890 = vunpack.c.l.b16 %v1853
    %v1891 = vunpack.c.l.b16 %v1854
    %v1892 = vunpack.c.l.b16 %v1855
    %v1893 = vunpack.c.l.b16 %v1856
    %v1894 = vunpack.c.l.b16 %v1857
    %v1895 = vunpack.c.l.b16 %v1858
    %v1896 = vunpack.c.l.b16 %v1859
    %v1897 = vunpack.c.l.b16 %v1860
    %v1898 = vunpack.c.l.b16 %v1861
    %v1899 = vunpack.c.l.b16 %v1862
    %v1900 = vunpack.c.l.b16 %v1863
    %v1901 = vunpack.c.l.b16 %v1864
    %v1902 = vunpack.c.l.b16 %v1865
    %v1903 = vpack.c.b16 %v1888, %v1887
    %v1904 = vpack.c.b16 %v1890, %v1889
    %v1905 = vpack.c.b16 %v1892, %v1891
    %v1906 = vpack.c.b16 %v1894, %v1893
    %v1907 = vpack.c.b16 %v1896, %v1895
    %v1908 = vpack.c.b16 %v1898, %v1897
    %v1909 = vpack.c.b16 %v1900, %v1899
    %v1910 = vpack.c.b16 %v1902, %v1901
    %1919 = vmatprep.subr.bf16.mxu0 0
    %1920 = vmatpush1.bf16.msra.mxu0 %v1903
    %1921 = vmatprep.subr.bf16.mxu0 0
    %1922 = vmatpush1.bf16.msra.mxu0 %v1904
    %1923 = vmatprep.subr.bf16.mxu0 0
    %1924 = vmatpush1.bf16.msra.mxu0 %v1905
    %1925 = vmatprep.subr.bf16.mxu0 0
    %1926 = vmatpush1.bf16.msra.mxu0 %v1906
    %1927 = vmatprep.subr.bf16.mxu0 0
    %1928 = vmatpush1.bf16.msra.mxu0 %v1907
    %1929 = vmatprep.subr.bf16.mxu0 0
    %1930 = vmatpush1.bf16.msra.mxu0 %v1908
    %1931 = vmatprep.subr.bf16.mxu0 0
    %1932 = vmatpush1.bf16.msra.mxu0 %v1909
    %1933 = vmatprep.subr.bf16.mxu0 0
    %1934 = vmatpush1.bf16.msra.mxu0 %v1910
    %1935 = vmatprep.subr.bf16.mxu0 0
    %1936 = vmatpush1.bf16.msra.mxu0 0
    %1937 = vmatprep.subr.bf16.mxu0 0
    %1938 = vmatpush1.bf16.msra.mxu0 0
    %1939 = vmatprep.subr.bf16.mxu0 0
    %1940 = vmatpush1.bf16.msra.mxu0 0
    %1941 = vmatprep.subr.bf16.mxu0 0
    %1942 = vmatpush1.bf16.msra.mxu0 0
    %1943 = vmatprep.subr.bf16.mxu0 0
    %1944 = vmatpush1.bf16.msra.mxu0 0
    %1945 = vmatprep.subr.bf16.mxu0 0
    %1946 = vmatpush1.bf16.msra.mxu0 0
    %1947 = vmatprep.subr.bf16.mxu0 0
    %1948 = vmatpush1.bf16.msra.mxu0 0
    %1949 = vmatprep.subr.bf16.mxu0 0
    %1950 = vmatpush1.bf16.msra.mxu0 0
    %1951 = vmatprep.mubr.bf16.mxu0 0
    %1952 = vmatmul.mubr.bf16.gmra.mrb[0].mxu0 %v1848
    %v1953 = vpop.f32.mrb[0].mxu0
    %v1954 = vadd.f32 %v1870, %v1953
    %v1955 = vpop.f32.mrb[0].mxu0
    %v1956 = vpop.f32.mrb[0].mxu0
    %v1957 = vadd.f32 %v1870, %v1956
    %v1958 = vpop.f32.mrb[0].mxu0
    %1959 = vmatprep.mubr.bf16.mxu0 0
    %1960 = vmatmul.mubr.bf16.gmra.mrb[0].mxu0 %v1849
    %v1961 = vpop.f32.mrb[0].mxu0
    %v1962 = vadd.f32 %v1870, %v1961
    %v1963 = vpop.f32.mrb[0].mxu0
    %v1964 = vpop.f32.mrb[0].mxu0
    %v1965 = vadd.f32 %v1870, %v1964
    %v1966 = vpop.f32.mrb[0].mxu0
    %1967 = vdwg.mxu0
    %1968 = vst [vmem:[#allocation7] sm:$0xff] %v1954
    %1969 = vst [vmem:[#allocation7 + $0x8] sm:$0xff] %v1957
    %1970 = vst [vmem:[#allocation7 + $0x10] sm:$0xff] %v1962
    %1971 = vst [vmem:[#allocation7 + $0x18] sm:$0xff] %v1965
    // Predicated region
    $region22: #{tpu_custom_call.1} parent=1 // pred_check
      _
    $region23: #{tpu_custom_call.1} parent=1 // pred_check_branch
      %1973 = sbr.rel (0) target = $region25
    $region24: #{tpu_custom_call.1} parent=1 // pred_region
      %s1975 = ssub.s32 512, 512
      %1976 = vsyncadd [#allocation4], %s1975
      %s1977 = sshll.u32 [#allocation7], 4
      %s1978 = int_to_ptr.vmem [resolvable:$true] %s1977
      %1983 = dma.vmem_to_hbm [thread:$0]  %s1978, 512, %s3, [#allocation4], 128, 128, 8
    $region25: #{tpu_custom_call.1} parent=1 // pred_fallthru
      _
    // Predicated region
    $region26: #{tpu_custom_call.1} parent=1 // pred_check
      _
    $region27: #{tpu_custom_call.1} parent=1 // pred_check_branch
      %1985 = sbr.rel (0) target = $region29
    $region28: #{tpu_custom_call.1} parent=1 // pred_region
      %1986 = dma.done [#allocation4], 512
    $region29: #{tpu_custom_call.1} parent=1 // pred_fallthru
      _
    %1987 = vsyncpa [#allocation3], 1
    %1988 = vsyncpa [#allocation6], 1
    %1989 = vsyncpa [#allocation4], 1

</llo_original>
